<compile_context>
chip_gen: v7x
topology: tpu7x:2x2x1
jax: 0.10.0
libtpu: 0.0.40
codegen_flags: <defaults>
</compile_context>

<pallas_src>
import math
import functools

import jax
import jax.numpy as jnp
from jax.experimental import pallas as pl
from jax.experimental.pallas import tpu as pltpu

NORM_EPS = 1e-12    # F.normalize eps


def _l2_normalize(x, eps=NORM_EPS):
    # x / max(||x||, eps)  ==  x * rsqrt(max(||x||^2, eps^2))
    sumsq = jnp.sum(x * x, axis=-1, keepdims=True)
    return x * jax.lax.rsqrt(jnp.maximum(sumsq, eps * eps))


def _arcface_head_kernel(label_ref, xn_ref, w_ref, out_ref, *,
                         tile_c, s, cos_m, sin_m, th, mm, dot_dtype):
    # label_ref: (B, 1) int32        — target class per row (block-resident)
    # xn_ref:    (B, E) f32          — L2-normalized embeddings (block-resident)
    # w_ref:     (tile_c, E)         — streamed slice of the class-weight matrix
    # out_ref:   (B, tile_c) f32     — ArcFace logits for this class tile
    j = pl.program_id(0)

    # F.normalize(weight, dim=1) on this tile: f32 math, rsqrt goes to the EUP
    # slot, the remaining multiply is cheap VPU work.
    w = w_ref[...].astype(jnp.float32)
    sumsq = jnp.sum(w * w, axis=-1, keepdims=True)
    w_n = w * jax.lax.rsqrt(jnp.maximum(sumsq, NORM_EPS * NORM_EPS))

    # cosine = x_n @ w_n.T — contract the last dim of both operands so the MXU
    # consumes the weight tile in its natural (C, E) layout (no XLU transpose).
    cosine = jax.lax.dot_general(
        xn_ref[...].astype(dot_dtype), w_n.astype(dot_dtype),
        dimension_numbers=(((1,), (1,)), ((), ())),
        preferred_element_type=jnp.float32)

    # sine = sqrt(clamp(1 - cosine^2, 0, 1)); additive angular margin.
    sine = jnp.sqrt(jnp.clip(1.0 - cosine * cosine, 0.0, 1.0))
    phi = cosine * cos_m - sine * sin_m
    phi = jnp.where(cosine > th, phi, cosine - mm)   # easy_margin=False path

    # one_hot.scatter_(1, label, 1) -> select phi at the target column of this
    # tile; the scalar tile offset is applied to the (B,1) label, not the iota.
    b, tc = out_ref.shape
    col = jax.lax.broadcasted_iota(jnp.int32, (b, tc), 1)
    one_hot = col == (label_ref[...] - j * tile_c)

    out_ref[...] = jnp.where(one_hot, phi, cosine) * s


def arcface_head(x_n, weight, label, *, s=64.0, m=0.5, tile_c=2048,
                 dot_dtype=jnp.bfloat16):
    """Arcface_Head.forward.  x_n: (B, E) already-normalized embeddings,
    weight: (C, E) class weights (any float dtype; bf16 recommended for
    streaming), label: (B,) int."""
    b, e = x_n.shape
    c, e2 = weight.shape
    assert e == e2

    # Lane-dense class tile; stays well inside the scoped-VMEM budget on every
    # generation (v7x's 64 MiB included) even when double-buffered.
    tile_c = min(tile_c, pl.cdiv(c, 128) * 128)
    c_pad = pl.cdiv(c, tile_c) * tile_c
    if c_pad != c:
        # Zero rows normalize to zero (eps clamp), so padded columns are 0*s
        # and get sliced off below.
        weight = jnp.pad(weight, ((0, c_pad - c), (0, 0)))

    label2d = label.astype(jnp.int32).reshape(b, 1)
    cos_m, sin_m = math.cos(m), math.sin(m)
    th, mm = math.cos(math.pi - m), math.sin(math.pi - m) * m

    kernel = functools.partial(
        _arcface_head_kernel, tile_c=tile_c, s=float(s), cos_m=cos_m,
        sin_m=sin_m, th=th, mm=mm, dot_dtype=dot_dtype)

    out = pl.pallas_call(
        kernel,
        out_shape=jax.ShapeDtypeStruct((b, c_pad), jnp.float32),
        grid_spec=pltpu.PrefetchScalarGridSpec(
            num_scalar_prefetch=0,
            grid=(c_pad // tile_c,),
            in_specs=[
                pl.BlockSpec((b, 1), lambda j: (0, 0)),        # label (resident)
                pl.BlockSpec((b, e), lambda j: (0, 0)),        # x_n   (resident)
                pl.BlockSpec((tile_c, e), lambda j: (j, 0)),   # weight tile
            ],
            out_specs=pl.BlockSpec((b, tile_c), lambda j: (0, j)),
        ),
        compiler_params=pltpu.CompilerParams(
            dimension_semantics=("parallel",)),
    )(label2d, x_n.astype(jnp.float32), weight)

    return out[:, :c] if c_pad != c else out


def arcface_forward(x, weight, label, *, s=32.0, m=0.5, tile_c=2048,
                    dot_dtype=jnp.bfloat16):
    """Arcface.forward (train mode), given the backbone embedding x (B, E)."""
    # F.normalize(x) — hoisted out of the per-class-tile loop (perf review).
    x_n = _l2_normalize(x.astype(jnp.float32))
    return arcface_head(x_n, weight, label, s=s, m=m, tile_c=tile_c,
                        dot_dtype=dot_dtype)


def _reference(x, weight, label, *, s=32.0, m=0.5, dot_dtype=jnp.float32):
    """Pure-JAX mirror of the PyTorch forward (train mode)."""
    cos_m, sin_m = math.cos(m), math.sin(m)
    th, mm = math.cos(math.pi - m), math.sin(math.pi - m) * m
    x = x.astype(jnp.float32)
    w = weight.astype(jnp.float32)
    x_n = x / jnp.maximum(jnp.linalg.norm(x, axis=1, keepdims=True), NORM_EPS)
    w_n = w / jnp.maximum(jnp.linalg.norm(w, axis=1, keepdims=True), NORM_EPS)
    cosine = jnp.dot(x_n.astype(dot_dtype), w_n.astype(dot_dtype).T,
                     preferred_element_type=jnp.float32)
    sine = jnp.sqrt(jnp.clip(1.0 - cosine ** 2, 0.0, 1.0))
    phi = cosine * cos_m - sine * sin_m
    phi = jnp.where(cosine > th, phi, cosine - mm)
    one_hot = jax.nn.one_hot(label, weight.shape[0], dtype=jnp.float32)
    return (one_hot * phi + (1.0 - one_hot) * cosine) * s


if __name__ == "__main__":
    key = jax.random.PRNGKey(0)
    k_x, k_w, k_l = jax.random.split(key, 3)

    B = 8               # batch
    EMBED = 128         # embedding_size for the mobilefacenet backbone
    C = 10575           # num_classes (module default)
    S = 32.0            # s=32 (Arcface.__init__ with mobilefacenet backbone)
    M = 0.5             # m

    # Backbone-embedding stand-in (output of MobileFaceNet, flattened).
    x = jax.random.normal(k_x, (B, EMBED), dtype=jnp.float32)

    # Xavier-uniform init of the (num_classes, embedding_size) head weight.
    limit = math.sqrt(6.0 / (C + EMBED))
    w_f32 = jax.random.uniform(k_w, (C, EMBED), dtype=jnp.float32,
                               minval=-limit, maxval=limit)
    w_bf16 = w_f32.astype(jnp.bfloat16)   # weights stored/streamed in bf16

    label = jax.random.randint(k_l, (B,), 0, C, dtype=jnp.int32)

    # --- strict f32 path: validates the kernel math against the PyTorch-
    # --- faithful reference at tight tolerance.
    out_f32 = jax.block_until_ready(
        arcface_forward(x, w_f32, label, s=S, m=M, dot_dtype=jnp.float32))
    ref_f32 = _reference(x, w_f32, label, s=S, m=M)
    assert out_f32.shape == (B, C)
    assert jnp.allclose(out_f32, ref_f32, atol=5e-4, rtol=1e-4), (
        float(jnp.max(jnp.abs(out_f32 - ref_f32))))

    # --- fast path: bf16-stored weight streamed to the kernel.
    out_bf16 = jax.block_until_ready(
        arcface_forward(x, w_bf16, label, s=S, m=M))
    assert out_bf16.shape == (B, C)
    ref_matched = _reference(x, w_bf16, label, s=S, m=M,
                             dot_dtype=jnp.bfloat16)
    assert jnp.allclose(out_bf16, ref_matched, atol=1e-2, rtol=1e-3), (
        float(jnp.max(jnp.abs(out_bf16 - ref_matched))))
    # bf16-aware sanity bound against the full-f32 reference (s * bf16 eps).
    assert float(jnp.max(jnp.abs(out_bf16 - ref_f32))) < 0.5

    print("KERNEL_OK")
</pallas_src>

<mosaic_0001>
module attributes {stable_mosaic.version = 11 : i64} {
  func.func @_arcface_head_kernel(%arg0: i32, %arg1: memref<8x1xi32, #tpu.memory_space<vmem>>, %arg2: memref<8x128xf32, #tpu.memory_space<vmem>>, %arg3: memref<2048x128xf32, #tpu.memory_space<vmem>>, %arg4: memref<8x2048xf32, #tpu.memory_space<vmem>>) attributes {dimension_semantics = [#tpu.dimension_semantics<parallel>], iteration_bounds = array<i64: 6>, scalar_prefetch = 0 : i64, scratch_operands = 0 : i64, tpu.core_type = #tpu.core_type<tc>, window_params = [{pipeline_mode = #tpu.pipeline_mode<synchronous>, transform_indices = @transform_0, window_bounds = array<i64: 8, 1>}, {pipeline_mode = #tpu.pipeline_mode<synchronous>, transform_indices = @transform_1, window_bounds = array<i64: 8, 128>}, {transform_indices = @transform_2, window_bounds = array<i64: 2048, 128>}, {transform_indices = @transform_3, window_bounds = array<i64: 8, 2048>}]} {
    %c0 = arith.constant 0 : index
    %c0_0 = arith.constant 0 : index
    %0 = vector.load %arg3[%c0, %c0_0] : memref<2048x128xf32, #tpu.memory_space<vmem>>, vector<2048x128xf32>
    %1 = arith.mulf %0, %0 : vector<2048x128xf32>
    %cst = arith.constant dense<0.000000e+00> : vector<2048xf32>
    %2 = vector.multi_reduction <add>, %1, %cst [1] : vector<2048x128xf32> to vector<2048xf32>
    %3 = vector.shape_cast %2 : vector<2048xf32> to vector<2048x1xf32>
    %cst_1 = arith.constant 1.000000e-24 : f32
    %4 = vector.broadcast %cst_1 : f32 to vector<2048x1xf32>
    %5 = arith.maximumf %3, %4 : vector<2048x1xf32>
    %6 = math.rsqrt %5 : vector<2048x1xf32>
    %7 = vector.broadcast %6 : vector<2048x1xf32> to vector<2048x128xf32>
    %8 = arith.mulf %0, %7 : vector<2048x128xf32>
    %c0_2 = arith.constant 0 : index
    %c0_3 = arith.constant 0 : index
    %9 = vector.load %arg2[%c0_2, %c0_3] : memref<8x128xf32, #tpu.memory_space<vmem>>, vector<8x128xf32>
    %cst_4 = arith.constant dense<0.000000e+00> : vector<8x2048xf32>
    %10 = tpu.matmul %9, %8, %cst_4 {dimension_numbers = #tpu.dot_dimension_numbers<[1], [1], [0], [0], [0, 0, 1, 0], [], []>} : vector<8x128xf32>, vector<2048x128xf32>, vector<8x2048xf32> -> vector<8x2048xf32>
    %11 = arith.mulf %10, %10 : vector<8x2048xf32>
    %cst_5 = arith.constant 1.000000e+00 : f32
    %12 = vector.broadcast %cst_5 : f32 to vector<8x2048xf32>
    %13 = arith.subf %12, %11 : vector<8x2048xf32>
    %cst_6 = arith.constant 0.000000e+00 : f32
    %cst_7 = arith.constant 1.000000e+00 : f32
    %14 = vector.broadcast %cst_6 : f32 to vector<8x2048xf32>
    %15 = arith.maximumf %14, %13 : vector<8x2048xf32>
    %16 = vector.broadcast %cst_7 : f32 to vector<8x2048xf32>
    %17 = arith.minimumf %16, %15 : vector<8x2048xf32>
    %18 = math.sqrt %17 : vector<8x2048xf32>
    %cst_8 = arith.constant 0.87758255 : f32
    %19 = vector.broadcast %cst_8 : f32 to vector<8x2048xf32>
    %20 = arith.mulf %10, %19 : vector<8x2048xf32>
    %cst_9 = arith.constant 0.47942555 : f32
    %21 = vector.broadcast %cst_9 : f32 to vector<8x2048xf32>
    %22 = arith.mulf %18, %21 : vector<8x2048xf32>
    %23 = arith.subf %20, %22 : vector<8x2048xf32>
    %cst_10 = arith.constant -0.87758255 : f32
    %24 = vector.broadcast %cst_10 : f32 to vector<8x2048xf32>
    %25 = arith.cmpf ogt, %10, %24 : vector<8x2048xf32>
    %cst_11 = arith.constant 0.239712775 : f32
    %26 = vector.broadcast %cst_11 : f32 to vector<8x2048xf32>
    %27 = arith.subf %10, %26 : vector<8x2048xf32>
    %28 = arith.select %25, %23, %27 : vector<8x2048xi1>, vector<8x2048xf32>
    %29 = tpu.iota {dimensions = array<i32: 1>} : vector<8x2048xi32>
    %c0_12 = arith.constant 0 : index
    %c0_13 = arith.constant 0 : index
    %30 = vector.load %arg1[%c0_12, %c0_13] : memref<8x1xi32, #tpu.memory_space<vmem>>, vector<8x1xi32>
    %c2048_i32 = arith.constant 2048 : i32
    %31 = arith.muli %arg0, %c2048_i32 : i32
    %32 = vector.broadcast %31 : i32 to vector<8x1xi32>
    %33 = arith.subi %30, %32 : vector<8x1xi32>
    %34 = vector.broadcast %33 : vector<8x1xi32> to vector<8x2048xi32>
    %35 = arith.cmpi eq, %29, %34 : vector<8x2048xi32>
    %36 = arith.select %35, %28, %10 : vector<8x2048xi1>, vector<8x2048xf32>
    %cst_14 = arith.constant 3.200000e+01 : f32
    %37 = vector.broadcast %cst_14 : f32 to vector<8x2048xf32>
    %38 = arith.mulf %36, %37 : vector<8x2048xf32>
    %c0_15 = arith.constant 0 : index
    %c0_16 = arith.constant 0 : index
    %39 = vector.load %arg4[%c0_15, %c0_16] : memref<8x2048xf32, #tpu.memory_space<vmem>>, vector<8x2048xf32>
    tpu.vector_store %arg4[%c0_15, %c0_16], %38 {strides = array<i32>} : memref<8x2048xf32, #tpu.memory_space<vmem>>, vector<8x2048xf32>,
    return
  }
  func.func @transform_0(%arg0: i32) -> (i32, i32) {
    %c0_i32 = arith.constant 0 : i32
    %c0_i32_0 = arith.constant 0 : i32
    %c0_i32_1 = arith.constant 0 : i32
    return %c0_i32, %c0_i32_0 : i32, i32
  }
  func.func @transform_1(%arg0: i32) -> (i32, i32) {
    %c0_i32 = arith.constant 0 : i32
    %c0_i32_0 = arith.constant 0 : i32
    %c0_i32_1 = arith.constant 0 : i32
    return %c0_i32, %c0_i32_0 : i32, i32
  }
  func.func @transform_2(%arg0: i32) -> (i32, i32) {
    %c0_i32 = arith.constant 0 : i32
    %c0_i32_0 = arith.constant 0 : i32
    return %arg0, %c0_i32 : i32, i32
  }
  func.func @transform_3(%arg0: i32) -> (i32, i32) {
    %c0_i32 = arith.constant 0 : i32
    %c0_i32_0 = arith.constant 0 : i32
    return %c0_i32, %arg0 : i32, i32
  }
}

</mosaic_0001>

<llo_original>
// kernel: tpu_custom_call.1
$region0: #{tpu_custom_call.1}
  #allocation0 [shape = 'u32[]', space=smem, size = 0x4, offset = 0x4, fixed_abs, tag = 'smem constant byte address 0x4 - core index']
  #allocation1 [shape = 'u32[144,128]{1,0:T(1,128)}', space=vmem, size = 0x12000, scoped, tag = 'internal scratch']
  %s0 = inlined_call_operand.vmem [shape: s32[8,1], index: 0, kind: input, shape index: {}]
  %s1 = inlined_call_operand.hbm [shape: f32[8,128], index: 1, kind: input, shape index: {}]
  %s2 = inlined_call_operand.hbm [shape: f32[12288,128], index: 2, kind: input, shape index: {}]
  %s3 = inlined_call_operand.hbm [shape: f32[8,12288], index: 3, kind: output, shape index: {}]
  %s4 = sld [smem:[#allocation0]]
  $region53: #{tpu_custom_call.1} parent=0
    _
  %s6 = ssub.s32 1, %s4
  %s7 = scalar_select 0, %s6, %s4
  $region1: #{tpu_custom_call.1} parent=0
    #allocation2 [shape = 'u8[4096]{0}', space=vmem, size = 0x1000, scoped, tag = 'input window, operand 1, single buffered']
    #allocation3 [shape = 's32[2]{0}', space=sflag, size = 0x8, scoped, tag = 'scoped memory for tpu_custom_call.1']
    #allocation4 [shape = 's32[2]{0}', space=sflag, size = 0x8, scoped, tag = 'scoped memory for tpu_custom_call.1']
    #allocation5 [shape = 'u8[2097152]{0}', space=vmem, size = 0x200000, scoped, tag = 'input window, operand 2']
    #allocation6 [shape = 's32[2]{0}', space=sflag, size = 0x8, scoped, tag = 'scoped memory for tpu_custom_call.1']
    #allocation7 [shape = 'u8[131072]{0}', space=vmem, size = 0x20000, scoped, tag = 'output window, operand 0']
    %8 = vsyncpa [#allocation3], 0
    %9 = vsyncpa [#allocation6], 0
    %s10 = scalar_lea.sflag [#allocation6], 1
    %11 = vsyncpa %s10, 0
    %12 = vsyncpa [#allocation4], 0
    %s13 = scalar_lea.sflag [#allocation4], 1
    %14 = vsyncpa %s13, 0
    loop: start=0, step=1, limit=8
    $region2: #{tpu_custom_call.1} parent=1 // loop_pre_header
      _
    $region3: #{tpu_custom_call.1} parent=1 // loop_header
      %s16 = sphi 0, %s20
      %p17 = scmp.ge.s32.totalorder %s16, 8
      %s24 = sphi 0, %s24
      %s26 = sphi 0, %s24
      %s27 = sphi 0, %s26
      %s41 = sphi 0, %s27
      %s45 = sphi 0, %s45
      %s47 = sphi 0, %s45
      %s48 = sphi 0, %s47
      %s62 = sphi 0, %s48
      %s68 = sphi 0, %s70
      %s71 = sphi 0, %s68
      %s72 = sphi 0, %s71
      %s88 = sphi 0, %s72
      %s94 = sphi 0, %s96
      %s97 = sphi 0, %s94
      %s98 = sphi 0, %s97
      %s114 = sphi 0, %s98
    $region4: #{tpu_custom_call.1} parent=1 // loop_header_branch
      %19 = sbr.rel (%p17) target = $region8
    $region5: #{tpu_custom_call.1} parent=1 // loop_body
      %s21 = ssub.s32 %s16, 1
      %s22 = ssub.s32 %s16, 2
      %s23 = sadd.s32 %s16, 1
      %s25 = sadd.s32 %s24, 1
      %p28 = scmp.eq.s32.totalorder %s16, 5
      %p29 = scmp.ne.s32.totalorder %s24, %s26
      %p30 = scmp.eq.s32.totalorder %s16, 0
      %p31 = por %p29, %p30
      %p32 = scmp.ne.s32.totalorder %s24, %s26
      %p33 = scmp.eq.s32.totalorder %s21, 5
      %p34 = por %p32, %p33
      %p35 = scmp.ne.s32.totalorder %s26, %s27
      %p36 = scmp.eq.s32.totalorder %s21, 0
      %p37 = por %p35, %p36
      %p38 = scmp.ne.s32.totalorder %s26, %s27
      %p39 = scmp.eq.s32.totalorder %s22, 5
      %p40 = por %p38, %p39
      %p42 = scmp.ne.s32.totalorder %s27, %s41
      %p43 = scmp.eq.s32.totalorder %s22, 0
      %p44 = por %p42, %p43
      %s46 = sadd.s32 %s45, 1
      %p49 = scmp.eq.s32.totalorder %s16, 5
      %p50 = scmp.ne.s32.totalorder %s45, %s47
      %p51 = scmp.eq.s32.totalorder %s16, 0
      %p52 = por %p50, %p51
      %p53 = scmp.ne.s32.totalorder %s45, %s47
      %p54 = scmp.eq.s32.totalorder %s21, 5
      %p55 = por %p53, %p54
      %p56 = scmp.ne.s32.totalorder %s47, %s48
      %p57 = scmp.eq.s32.totalorder %s21, 0
      %p58 = por %p56, %p57
      %p59 = scmp.ne.s32.totalorder %s47, %s48
      %p60 = scmp.eq.s32.totalorder %s22, 5
      %p61 = por %p59, %p60
      %p63 = scmp.ne.s32.totalorder %s48, %s62
      %p64 = scmp.eq.s32.totalorder %s22, 0
      %p65 = por %p63, %p64
      %s66 = ssub.s32 %s16, %s23
      %p67 = scmp.eq.s32.totalorder %s66, 0
      %s69 = sadd.s32 %s68, 1
      %s70 = scalar_select %p67, %s68, %s69
      %p73 = pneg %p67
      %p74 = scmp.eq.s32.totalorder %s16, 5
      %p75 = por %p73, %p74
      %p76 = scmp.ne.s32.totalorder %s68, %s71
      %p77 = scmp.eq.s32.totalorder %s16, 0
      %p78 = por %p76, %p77
      %p79 = scmp.ne.s32.totalorder %s68, %s71
      %p80 = scmp.eq.s32.totalorder %s21, 5
      %p81 = por %p79, %p80
      %p82 = scmp.ne.s32.totalorder %s71, %s72
      %p83 = scmp.eq.s32.totalorder %s21, 0
      %p84 = por %p82, %p83
      %p85 = scmp.ne.s32.totalorder %s71, %s72
      %p86 = scmp.eq.s32.totalorder %s22, 5
      %p87 = por %p85, %p86
      %p89 = scmp.ne.s32.totalorder %s72, %s88
      %p90 = scmp.eq.s32.totalorder %s22, 0
      %p91 = por %p89, %p90
      %s92 = ssub.s32 %s16, %s23
      %p93 = scmp.eq.s32.totalorder %s92, 0
      %s95 = sadd.s32 %s94, 1
      %s96 = scalar_select %p93, %s94, %s95
      %p99 = pneg %p93
      %p100 = scmp.eq.s32.totalorder %s16, 5
      %p101 = por %p99, %p100
      %p102 = scmp.ne.s32.totalorder %s94, %s97
      %p103 = scmp.eq.s32.totalorder %s16, 0
      %p104 = por %p102, %p103
      %p105 = scmp.ne.s32.totalorder %s94, %s97
      %p106 = scmp.eq.s32.totalorder %s21, 5
      %p107 = por %p105, %p106
      %p108 = scmp.ne.s32.totalorder %s97, %s98
      %p109 = scmp.eq.s32.totalorder %s21, 0
      %p110 = por %p108, %p109
      %p111 = scmp.ne.s32.totalorder %s97, %s98
      %p112 = scmp.eq.s32.totalorder %s22, 5
      %p113 = por %p111, %p112
      %p115 = scmp.ne.s32.totalorder %s98, %s114
      %p116 = scmp.eq.s32.totalorder %s22, 0
      %p117 = por %p115, %p116
      %p118 = scmp.le.s32.totalorder 1, %s16
      %p119 = scmp.lt.s32.totalorder %s16, 7
      %p120 = pnand %p118, %p119
      %p121 = pneg %p120
      // Predicated region
      $region9: #{tpu_custom_call.1} parent=5 // pred_check
        _
      $region10: #{tpu_custom_call.1} parent=5 // pred_check_branch
        %123 = sbr.rel (%p120) target = $region12
      $region11: #{tpu_custom_call.1} parent=5 // pred_region
        %s124 = ssub.s32 %s16, 1
        // Predicated region
        $region13: #{tpu_custom_call.1} parent=11 // pred_check
          %p125 = pneg %p37
        $region14: #{tpu_custom_call.1} parent=11 // pred_check_branch
          %127 = sbr.rel (%p125) target = $region16
        $region15: #{tpu_custom_call.1} parent=11 // pred_region
          _
        $region16: #{tpu_custom_call.1} parent=11 // pred_fallthru
          _
        // Predicated region
        $region17: #{tpu_custom_call.1} parent=11 // pred_check
          %p128 = pneg %p58
        $region18: #{tpu_custom_call.1} parent=11 // pred_check_branch
          %130 = sbr.rel (%p128) target = $region20
        $region19: #{tpu_custom_call.1} parent=11 // pred_region
          %s132 = ssub.s32 128, 128
          %133 = vsyncadd [#allocation3], %s132
          %s135 = sshll.u32 [#allocation2], 4
          %s136 = int_to_ptr.vmem [resolvable:$true] %s135
          %138 = dma.hbm_to_vmem [thread:$0]  %s1, 128, %s136, [#allocation3]
        $region20: #{tpu_custom_call.1} parent=11 // pred_fallthru
          _
      $region12: #{tpu_custom_call.1} parent=5 // pred_fallthru
        _
      %p139 = scmp.lt.s32.totalorder %s16, 6
      // Predicated region
      $region21: #{tpu_custom_call.1} parent=5 // pred_check
        %p140 = pneg %p139
      $region22: #{tpu_custom_call.1} parent=5 // pred_check_branch
        %142 = sbr.rel (%p140) target = $region24
      $region23: #{tpu_custom_call.1} parent=5 // pred_region
        // Predicated region
        $region25: #{tpu_custom_call.1} parent=23 // pred_check
          %p143 = pneg %p78
        $region26: #{tpu_custom_call.1} parent=23 // pred_check_branch
          %145 = sbr.rel (%p143) target = $region28
        $region27: #{tpu_custom_call.1} parent=23 // pred_region
          %s146 = sand.u32 %s68, 1
          %s147 = scalar_lea.sflag [#allocation6], %s146
          %s148 = sand.u32 %s68, 1
          %s149 = smul.addr %s148, 2048
          %s150 = scalar_lea.vmem [#allocation5], %s149
          %s151 = smul.u32 256, %s16
          %s153 = ssub.s32 32768, 32768
          %154 = vsyncadd %s147, %s153
          %s155 = smul.addr %s151, 128
          %s156 = scalar_lea.hbm %s2, %s155
          %s157 = sshll.u32 %s150, 4
          %s158 = int_to_ptr.vmem [resolvable:$true] %s157
          %163 = dma.hbm_to_vmem [thread:$0]  %s156, 32768, %s158, %s147, 128, 128, 8
        $region28: #{tpu_custom_call.1} parent=23 // pred_fallthru
          _
      $region24: #{tpu_custom_call.1} parent=5 // pred_fallthru
        _
      %p164 = scmp.le.s32.totalorder 1, %s16
      %p165 = scmp.lt.s32.totalorder %s16, 7
      %p166 = pnand %p164, %p165
      %p167 = pneg %p166
      // Predicated region
      $region29: #{tpu_custom_call.1} parent=5 // pred_check
        _
      $region30: #{tpu_custom_call.1} parent=5 // pred_check_branch
        %169 = sbr.rel (%p166) target = $region32
      $region31: #{tpu_custom_call.1} parent=5 // pred_region
        %s170 = ssub.s32 %s16, 1
        // Predicated region
        $region33: #{tpu_custom_call.1} parent=31 // pred_check
          %p171 = pneg %p58
        $region34: #{tpu_custom_call.1} parent=31 // pred_check_branch
          %173 = sbr.rel (%p171) target = $region36
        $region35: #{tpu_custom_call.1} parent=31 // pred_region
          %174 = dma.done [#allocation3], 128
        $region36: #{tpu_custom_call.1} parent=31 // pred_fallthru
          _
        %s175 = sand.u32 %s71, 1
        %s176 = scalar_lea.sflag [#allocation6], %s175
        %s177 = sand.u32 %s71, 1
        %s178 = smul.addr %s177, 2048
        %s179 = scalar_lea.vmem [#allocation5], %s178
        // Predicated region
        $region37: #{tpu_custom_call.1} parent=31 // pred_check
          %p180 = pneg %p84
        $region38: #{tpu_custom_call.1} parent=31 // pred_check_branch
          %182 = sbr.rel (%p180) target = $region40
        $region39: #{tpu_custom_call.1} parent=31 // pred_region
          %183 = dma.done %s176, 32768
        $region40: #{tpu_custom_call.1} parent=31 // pred_fallthru
          _
        %p184 = pneg %p37
        %p185 = pneg %p34
        %p186 = pneg %p58
        %p187 = pneg %p55
        %s188 = sand.u32 %s71, 1
        %s189 = scalar_lea.sflag [#allocation6], %s188
        %s190 = sand.u32 %s71, 1
        %s191 = smul.addr %s190, 2048
        %s192 = scalar_lea.vmem [#allocation5], %s191
        %p193 = pneg %p84
        %p194 = pneg %p81
        %p195 = pneg %p110
        %p196 = pneg %p107
        %s197 = sand.u32 %s97, 1
        %s198 = scalar_lea.sflag [#allocation4], %s197
        %s199 = sand.u32 %s97, 1
        %s200 = smul.addr %s199, 128
        %s201 = scalar_lea.vmem [#allocation7], %s200
        %s202 = smul.u32 256, %s21
        %s203 = smul.u32 16, %s21
        %v204 = vld [vmem:[%s179] sm:$0xff]
        %v205 = vld [vmem:[%s179 + $0x8] sm:$0xff]
        %v206 = vld [vmem:[%s179 + $0x10] sm:$0xff]
        %v207 = vld [vmem:[%s179 + $0x18] sm:$0xff]
        %v208 = vld [vmem:[%s179 + $0x20] sm:$0xff]
        %v209 = vld [vmem:[%s179 + $0x28] sm:$0xff]
        %v210 = vld [vmem:[%s179 + $0x30] sm:$0xff]
        %v211 = vld [vmem:[%s179 + $0x38] sm:$0xff]
        %v212 = vld [vmem:[%s179 + $0x40] sm:$0xff]
        %v213 = vld [vmem:[%s179 + $0x48] sm:$0xff]
        %v214 = vld [vmem:[%s179 + $0x50] sm:$0xff]
        %v215 = vld [vmem:[%s179 + $0x58] sm:$0xff]
        %v216 = vld [vmem:[%s179 + $0x60] sm:$0xff]
        %v217 = vld [vmem:[%s179 + $0x68] sm:$0xff]
        %v218 = vld [vmem:[%s179 + $0x70] sm:$0xff]
        %v219 = vld [vmem:[%s179 + $0x78] sm:$0xff]
        %v220 = vld [vmem:[%s179 + $0x80] sm:$0xff]
        %v221 = vld [vmem:[%s179 + $0x88] sm:$0xff]
        %v222 = vld [vmem:[%s179 + $0x90] sm:$0xff]
        %v223 = vld [vmem:[%s179 + $0x98] sm:$0xff]
        %v224 = vld [vmem:[%s179 + $0xa0] sm:$0xff]
        %v225 = vld [vmem:[%s179 + $0xa8] sm:$0xff]
        %v226 = vld [vmem:[%s179 + $0xb0] sm:$0xff]
        %v227 = vld [vmem:[%s179 + $0xb8] sm:$0xff]
        %v228 = vld [vmem:[%s179 + $0xc0] sm:$0xff]
        %v229 = vld [vmem:[%s179 + $0xc8] sm:$0xff]
        %v230 = vld [vmem:[%s179 + $0xd0] sm:$0xff]
        %v231 = vld [vmem:[%s179 + $0xd8] sm:$0xff]
        %v232 = vld [vmem:[%s179 + $0xe0] sm:$0xff]
        %v233 = vld [vmem:[%s179 + $0xe8] sm:$0xff]
        %v234 = vld [vmem:[%s179 + $0xf0] sm:$0xff]
        %v235 = vld [vmem:[%s179 + $0xf8] sm:$0xff]
        %v236 = vld [vmem:[%s179 + $0x100] sm:$0xff]
        %v237 = vld [vmem:[%s179 + $0x108] sm:$0xff]
        %v238 = vld [vmem:[%s179 + $0x110] sm:$0xff]
        %v239 = vld [vmem:[%s179 + $0x118] sm:$0xff]
        %v240 = vld [vmem:[%s179 + $0x120] sm:$0xff]
        %v241 = vld [vmem:[%s179 + $0x128] sm:$0xff]
        %v242 = vld [vmem:[%s179 + $0x130] sm:$0xff]
        %v243 = vld [vmem:[%s179 + $0x138] sm:$0xff]
        %v244 = vld [vmem:[%s179 + $0x140] sm:$0xff]
        %v245 = vld [vmem:[%s179 + $0x148] sm:$0xff]
        %v246 = vld [vmem:[%s179 + $0x150] sm:$0xff]
        %v247 = vld [vmem:[%s179 + $0x158] sm:$0xff]
        %v248 = vld [vmem:[%s179 + $0x160] sm:$0xff]
        %v249 = vld [vmem:[%s179 + $0x168] sm:$0xff]
        %v250 = vld [vmem:[%s179 + $0x170] sm:$0xff]
        %v251 = vld [vmem:[%s179 + $0x178] sm:$0xff]
        %v252 = vld [vmem:[%s179 + $0x180] sm:$0xff]
        %v253 = vld [vmem:[%s179 + $0x188] sm:$0xff]
        %v254 = vld [vmem:[%s179 + $0x190] sm:$0xff]
        %v255 = vld [vmem:[%s179 + $0x198] sm:$0xff]
        %v256 = vld [vmem:[%s179 + $0x1a0] sm:$0xff]
        %v257 = vld [vmem:[%s179 + $0x1a8] sm:$0xff]
        %v258 = vld [vmem:[%s179 + $0x1b0] sm:$0xff]
        %v259 = vld [vmem:[%s179 + $0x1b8] sm:$0xff]
        %v260 = vld [vmem:[%s179 + $0x1c0] sm:$0xff]
        %v261 = vld [vmem:[%s179 + $0x1c8] sm:$0xff]
        %v262 = vld [vmem:[%s179 + $0x1d0] sm:$0xff]
        %v263 = vld [vmem:[%s179 + $0x1d8] sm:$0xff]
        %v264 = vld [vmem:[%s179 + $0x1e0] sm:$0xff]
        %v265 = vld [vmem:[%s179 + $0x1e8] sm:$0xff]
        %v266 = vld [vmem:[%s179 + $0x1f0] sm:$0xff]
        %v267 = vld [vmem:[%s179 + $0x1f8] sm:$0xff]
        %v268 = vld [vmem:[%s179 + $0x200] sm:$0xff]
        %v269 = vld [vmem:[%s179 + $0x208] sm:$0xff]
        %v270 = vld [vmem:[%s179 + $0x210] sm:$0xff]
        %v271 = vld [vmem:[%s179 + $0x218] sm:$0xff]
        %v272 = vld [vmem:[%s179 + $0x220] sm:$0xff]
        %v273 = vld [vmem:[%s179 + $0x228] sm:$0xff]
        %v274 = vld [vmem:[%s179 + $0x230] sm:$0xff]
        %v275 = vld [vmem:[%s179 + $0x238] sm:$0xff]
        %v276 = vld [vmem:[%s179 + $0x240] sm:$0xff]
        %v277 = vld [vmem:[%s179 + $0x248] sm:$0xff]
        %v278 = vld [vmem:[%s179 + $0x250] sm:$0xff]
        %v279 = vld [vmem:[%s179 + $0x258] sm:$0xff]
        %v280 = vld [vmem:[%s179 + $0x260] sm:$0xff]
        %v281 = vld [vmem:[%s179 + $0x268] sm:$0xff]
        %v282 = vld [vmem:[%s179 + $0x270] sm:$0xff]
        %v283 = vld [vmem:[%s179 + $0x278] sm:$0xff]
        %v284 = vld [vmem:[%s179 + $0x280] sm:$0xff]
        %v285 = vld [vmem:[%s179 + $0x288] sm:$0xff]
        %v286 = vld [vmem:[%s179 + $0x290] sm:$0xff]
        %v287 = vld [vmem:[%s179 + $0x298] sm:$0xff]
        %v288 = vld [vmem:[%s179 + $0x2a0] sm:$0xff]
        %v289 = vld [vmem:[%s179 + $0x2a8] sm:$0xff]
        %v290 = vld [vmem:[%s179 + $0x2b0] sm:$0xff]
        %v291 = vld [vmem:[%s179 + $0x2b8] sm:$0xff]
        %v292 = vld [vmem:[%s179 + $0x2c0] sm:$0xff]
        %v293 = vld [vmem:[%s179 + $0x2c8] sm:$0xff]
        %v294 = vld [vmem:[%s179 + $0x2d0] sm:$0xff]
        %v295 = vld [vmem:[%s179 + $0x2d8] sm:$0xff]
        %v296 = vld [vmem:[%s179 + $0x2e0] sm:$0xff]
        %v297 = vld [vmem:[%s179 + $0x2e8] sm:$0xff]
        %v298 = vld [vmem:[%s179 + $0x2f0] sm:$0xff]
        %v299 = vld [vmem:[%s179 + $0x2f8] sm:$0xff]
        %v300 = vld [vmem:[%s179 + $0x300] sm:$0xff]
        %v301 = vld [vmem:[%s179 + $0x308] sm:$0xff]
        %v302 = vld [vmem:[%s179 + $0x310] sm:$0xff]
        %v303 = vld [vmem:[%s179 + $0x318] sm:$0xff]
        %v304 = vld [vmem:[%s179 + $0x320] sm:$0xff]
        %v305 = vld [vmem:[%s179 + $0x328] sm:$0xff]
        %v306 = vld [vmem:[%s179 + $0x330] sm:$0xff]
        %v307 = vld [vmem:[%s179 + $0x338] sm:$0xff]
        %v308 = vld [vmem:[%s179 + $0x340] sm:$0xff]
        %v309 = vld [vmem:[%s179 + $0x348] sm:$0xff]
        %v310 = vld [vmem:[%s179 + $0x350] sm:$0xff]
        %v311 = vld [vmem:[%s179 + $0x358] sm:$0xff]
        %v312 = vld [vmem:[%s179 + $0x360] sm:$0xff]
        %v313 = vld [vmem:[%s179 + $0x368] sm:$0xff]
        %v314 = vld [vmem:[%s179 + $0x370] sm:$0xff]
        %v315 = vld [vmem:[%s179 + $0x378] sm:$0xff]
        %v316 = vld [vmem:[%s179 + $0x380] sm:$0xff]
        %v317 = vld [vmem:[%s179 + $0x388] sm:$0xff]
        %v318 = vld [vmem:[%s179 + $0x390] sm:$0xff]
        %v319 = vld [vmem:[%s179 + $0x398] sm:$0xff]
        %v320 = vld [vmem:[%s179 + $0x3a0] sm:$0xff]
        %v321 = vld [vmem:[%s179 + $0x3a8] sm:$0xff]
        %v322 = vld [vmem:[%s179 + $0x3b0] sm:$0xff]
        %v323 = vld [vmem:[%s179 + $0x3b8] sm:$0xff]
        %v324 = vld [vmem:[%s179 + $0x3c0] sm:$0xff]
        %v325 = vld [vmem:[%s179 + $0x3c8] sm:$0xff]
        %v326 = vld [vmem:[%s179 + $0x3d0] sm:$0xff]
        %v327 = vld [vmem:[%s179 + $0x3d8] sm:$0xff]
        %v328 = vld [vmem:[%s179 + $0x3e0] sm:$0xff]
        %v329 = vld [vmem:[%s179 + $0x3e8] sm:$0xff]
        %v330 = vld [vmem:[%s179 + $0x3f0] sm:$0xff]
        %v331 = vld [vmem:[%s179 + $0x3f8] sm:$0xff]
        %v332 = vld [vmem:[%s179 + $0x400] sm:$0xff]
        %v333 = vld [vmem:[%s179 + $0x408] sm:$0xff]
        %v334 = vld [vmem:[%s179 + $0x410] sm:$0xff]
        %v335 = vld [vmem:[%s179 + $0x418] sm:$0xff]
        %v336 = vld [vmem:[%s179 + $0x420] sm:$0xff]
        %v337 = vld [vmem:[%s179 + $0x428] sm:$0xff]
        %v338 = vld [vmem:[%s179 + $0x430] sm:$0xff]
        %v339 = vld [vmem:[%s179 + $0x438] sm:$0xff]
        %v340 = vld [vmem:[%s179 + $0x440] sm:$0xff]
        %v341 = vld [vmem:[%s179 + $0x448] sm:$0xff]
        %v342 = vld [vmem:[%s179 + $0x450] sm:$0xff]
        %v343 = vld [vmem:[%s179 + $0x458] sm:$0xff]
        %v344 = vld [vmem:[%s179 + $0x460] sm:$0xff]
        %v345 = vld [vmem:[%s179 + $0x468] sm:$0xff]
        %v346 = vld [vmem:[%s179 + $0x470] sm:$0xff]
        %v347 = vld [vmem:[%s179 + $0x478] sm:$0xff]
        %v348 = vld [vmem:[%s179 + $0x480] sm:$0xff]
        %v349 = vld [vmem:[%s179 + $0x488] sm:$0xff]
        %v350 = vld [vmem:[%s179 + $0x490] sm:$0xff]
        %v351 = vld [vmem:[%s179 + $0x498] sm:$0xff]
        %v352 = vld [vmem:[%s179 + $0x4a0] sm:$0xff]
        %v353 = vld [vmem:[%s179 + $0x4a8] sm:$0xff]
        %v354 = vld [vmem:[%s179 + $0x4b0] sm:$0xff]
        %v355 = vld [vmem:[%s179 + $0x4b8] sm:$0xff]
        %v356 = vld [vmem:[%s179 + $0x4c0] sm:$0xff]
        %v357 = vld [vmem:[%s179 + $0x4c8] sm:$0xff]
        %v358 = vld [vmem:[%s179 + $0x4d0] sm:$0xff]
        %v359 = vld [vmem:[%s179 + $0x4d8] sm:$0xff]
        %v360 = vld [vmem:[%s179 + $0x4e0] sm:$0xff]
        %v361 = vld [vmem:[%s179 + $0x4e8] sm:$0xff]
        %v362 = vld [vmem:[%s179 + $0x4f0] sm:$0xff]
        %v363 = vld [vmem:[%s179 + $0x4f8] sm:$0xff]
        %v364 = vld [vmem:[%s179 + $0x500] sm:$0xff]
        %v365 = vld [vmem:[%s179 + $0x508] sm:$0xff]
        %v366 = vld [vmem:[%s179 + $0x510] sm:$0xff]
        %v367 = vld [vmem:[%s179 + $0x518] sm:$0xff]
        %v368 = vld [vmem:[%s179 + $0x520] sm:$0xff]
        %v369 = vld [vmem:[%s179 + $0x528] sm:$0xff]
        %v370 = vld [vmem:[%s179 + $0x530] sm:$0xff]
        %v371 = vld [vmem:[%s179 + $0x538] sm:$0xff]
        %v372 = vld [vmem:[%s179 + $0x540] sm:$0xff]
        %v373 = vld [vmem:[%s179 + $0x548] sm:$0xff]
        %v374 = vld [vmem:[%s179 + $0x550] sm:$0xff]
        %v375 = vld [vmem:[%s179 + $0x558] sm:$0xff]
        %v376 = vld [vmem:[%s179 + $0x560] sm:$0xff]
        %v377 = vld [vmem:[%s179 + $0x568] sm:$0xff]
        %v378 = vld [vmem:[%s179 + $0x570] sm:$0xff]
        %v379 = vld [vmem:[%s179 + $0x578] sm:$0xff]
        %v380 = vld [vmem:[%s179 + $0x580] sm:$0xff]
        %v381 = vld [vmem:[%s179 + $0x588] sm:$0xff]
        %v382 = vld [vmem:[%s179 + $0x590] sm:$0xff]
        %v383 = vld [vmem:[%s179 + $0x598] sm:$0xff]
        %v384 = vld [vmem:[%s179 + $0x5a0] sm:$0xff]
        %v385 = vld [vmem:[%s179 + $0x5a8] sm:$0xff]
        %v386 = vld [vmem:[%s179 + $0x5b0] sm:$0xff]
        %v387 = vld [vmem:[%s179 + $0x5b8] sm:$0xff]
        %v388 = vld [vmem:[%s179 + $0x5c0] sm:$0xff]
        %v389 = vld [vmem:[%s179 + $0x5c8] sm:$0xff]
        %v390 = vld [vmem:[%s179 + $0x5d0] sm:$0xff]
        %v391 = vld [vmem:[%s179 + $0x5d8] sm:$0xff]
        %v392 = vld [vmem:[%s179 + $0x5e0] sm:$0xff]
        %v393 = vld [vmem:[%s179 + $0x5e8] sm:$0xff]
        %v394 = vld [vmem:[%s179 + $0x5f0] sm:$0xff]
        %v395 = vld [vmem:[%s179 + $0x5f8] sm:$0xff]
        %v396 = vld [vmem:[%s179 + $0x600] sm:$0xff]
        %v397 = vld [vmem:[%s179 + $0x608] sm:$0xff]
        %v398 = vld [vmem:[%s179 + $0x610] sm:$0xff]
        %v399 = vld [vmem:[%s179 + $0x618] sm:$0xff]
        %v400 = vld [vmem:[%s179 + $0x620] sm:$0xff]
        %v401 = vld [vmem:[%s179 + $0x628] sm:$0xff]
        %v402 = vld [vmem:[%s179 + $0x630] sm:$0xff]
        %v403 = vld [vmem:[%s179 + $0x638] sm:$0xff]
        %v404 = vld [vmem:[%s179 + $0x640] sm:$0xff]
        %v405 = vld [vmem:[%s179 + $0x648] sm:$0xff]
        %v406 = vld [vmem:[%s179 + $0x650] sm:$0xff]
        %v407 = vld [vmem:[%s179 + $0x658] sm:$0xff]
        %v408 = vld [vmem:[%s179 + $0x660] sm:$0xff]
        %v409 = vld [vmem:[%s179 + $0x668] sm:$0xff]
        %v410 = vld [vmem:[%s179 + $0x670] sm:$0xff]
        %v411 = vld [vmem:[%s179 + $0x678] sm:$0xff]
        %v412 = vld [vmem:[%s179 + $0x680] sm:$0xff]
        %v413 = vld [vmem:[%s179 + $0x688] sm:$0xff]
        %v414 = vld [vmem:[%s179 + $0x690] sm:$0xff]
        %v415 = vld [vmem:[%s179 + $0x698] sm:$0xff]
        %v416 = vld [vmem:[%s179 + $0x6a0] sm:$0xff]
        %v417 = vld [vmem:[%s179 + $0x6a8] sm:$0xff]
        %v418 = vld [vmem:[%s179 + $0x6b0] sm:$0xff]
        %v419 = vld [vmem:[%s179 + $0x6b8] sm:$0xff]
        %v420 = vld [vmem:[%s179 + $0x6c0] sm:$0xff]
        %v421 = vld [vmem:[%s179 + $0x6c8] sm:$0xff]
        %v422 = vld [vmem:[%s179 + $0x6d0] sm:$0xff]
        %v423 = vld [vmem:[%s179 + $0x6d8] sm:$0xff]
        %v424 = vld [vmem:[%s179 + $0x6e0] sm:$0xff]
        %v425 = vld [vmem:[%s179 + $0x6e8] sm:$0xff]
        %v426 = vld [vmem:[%s179 + $0x6f0] sm:$0xff]
        %v427 = vld [vmem:[%s179 + $0x6f8] sm:$0xff]
        %v428 = vld [vmem:[%s179 + $0x700] sm:$0xff]
        %v429 = vld [vmem:[%s179 + $0x708] sm:$0xff]
        %v430 = vld [vmem:[%s179 + $0x710] sm:$0xff]
        %v431 = vld [vmem:[%s179 + $0x718] sm:$0xff]
        %v432 = vld [vmem:[%s179 + $0x720] sm:$0xff]
        %v433 = vld [vmem:[%s179 + $0x728] sm:$0xff]
        %v434 = vld [vmem:[%s179 + $0x730] sm:$0xff]
        %v435 = vld [vmem:[%s179 + $0x738] sm:$0xff]
        %v436 = vld [vmem:[%s179 + $0x740] sm:$0xff]
        %v437 = vld [vmem:[%s179 + $0x748] sm:$0xff]
        %v438 = vld [vmem:[%s179 + $0x750] sm:$0xff]
        %v439 = vld [vmem:[%s179 + $0x758] sm:$0xff]
        %v440 = vld [vmem:[%s179 + $0x760] sm:$0xff]
        %v441 = vld [vmem:[%s179 + $0x768] sm:$0xff]
        %v442 = vld [vmem:[%s179 + $0x770] sm:$0xff]
        %v443 = vld [vmem:[%s179 + $0x778] sm:$0xff]
        %v444 = vld [vmem:[%s179 + $0x780] sm:$0xff]
        %v445 = vld [vmem:[%s179 + $0x788] sm:$0xff]
        %v446 = vld [vmem:[%s179 + $0x790] sm:$0xff]
        %v447 = vld [vmem:[%s179 + $0x798] sm:$0xff]
        %v448 = vld [vmem:[%s179 + $0x7a0] sm:$0xff]
        %v449 = vld [vmem:[%s179 + $0x7a8] sm:$0xff]
        %v450 = vld [vmem:[%s179 + $0x7b0] sm:$0xff]
        %v451 = vld [vmem:[%s179 + $0x7b8] sm:$0xff]
        %v452 = vld [vmem:[%s179 + $0x7c0] sm:$0xff]
        %v453 = vld [vmem:[%s179 + $0x7c8] sm:$0xff]
        %v454 = vld [vmem:[%s179 + $0x7d0] sm:$0xff]
        %v455 = vld [vmem:[%s179 + $0x7d8] sm:$0xff]
        %v456 = vld [vmem:[%s179 + $0x7e0] sm:$0xff]
        %v457 = vld [vmem:[%s179 + $0x7e8] sm:$0xff]
        %v458 = vld [vmem:[%s179 + $0x7f0] sm:$0xff]
        %v459 = vld [vmem:[%s179 + $0x7f8] sm:$0xff]
        %v460 = vmul.f32 %v204, %v204
        %v461 = vmul.f32 %v205, %v205
        %v462 = vmul.f32 %v206, %v206
        %v463 = vmul.f32 %v207, %v207
        %v464 = vmul.f32 %v208, %v208
        %v465 = vmul.f32 %v209, %v209
        %v466 = vmul.f32 %v210, %v210
        %v467 = vmul.f32 %v211, %v211
        %v468 = vmul.f32 %v212, %v212
        %v469 = vmul.f32 %v213, %v213
        %v470 = vmul.f32 %v214, %v214
        %v471 = vmul.f32 %v215, %v215
        %v472 = vmul.f32 %v216, %v216
        %v473 = vmul.f32 %v217, %v217
        %v474 = vmul.f32 %v218, %v218
        %v475 = vmul.f32 %v219, %v219
        %v476 = vmul.f32 %v220, %v220
        %v477 = vmul.f32 %v221, %v221
        %v478 = vmul.f32 %v222, %v222
        %v479 = vmul.f32 %v223, %v223
        %v480 = vmul.f32 %v224, %v224
        %v481 = vmul.f32 %v225, %v225
        %v482 = vmul.f32 %v226, %v226
        %v483 = vmul.f32 %v227, %v227
        %v484 = vmul.f32 %v228, %v228
        %v485 = vmul.f32 %v229, %v229
        %v486 = vmul.f32 %v230, %v230
        %v487 = vmul.f32 %v231, %v231
        %v488 = vmul.f32 %v232, %v232
        %v489 = vmul.f32 %v233, %v233
        %v490 = vmul.f32 %v234, %v234
        %v491 = vmul.f32 %v235, %v235
        %v492 = vmul.f32 %v236, %v236
        %v493 = vmul.f32 %v237, %v237
        %v494 = vmul.f32 %v238, %v238
        %v495 = vmul.f32 %v239, %v239
        %v496 = vmul.f32 %v240, %v240
        %v497 = vmul.f32 %v241, %v241
        %v498 = vmul.f32 %v242, %v242
        %v499 = vmul.f32 %v243, %v243
        %v500 = vmul.f32 %v244, %v244
        %v501 = vmul.f32 %v245, %v245
        %v502 = vmul.f32 %v246, %v246
        %v503 = vmul.f32 %v247, %v247
        %v504 = vmul.f32 %v248, %v248
        %v505 = vmul.f32 %v249, %v249
        %v506 = vmul.f32 %v250, %v250
        %v507 = vmul.f32 %v251, %v251
        %v508 = vmul.f32 %v252, %v252
        %v509 = vmul.f32 %v253, %v253
        %v510 = vmul.f32 %v254, %v254
        %v511 = vmul.f32 %v255, %v255
        %v512 = vmul.f32 %v256, %v256
        %v513 = vmul.f32 %v257, %v257
        %v514 = vmul.f32 %v258, %v258
        %v515 = vmul.f32 %v259, %v259
        %v516 = vmul.f32 %v260, %v260
        %v517 = vmul.f32 %v261, %v261
        %v518 = vmul.f32 %v262, %v262
        %v519 = vmul.f32 %v263, %v263
        %v520 = vmul.f32 %v264, %v264
        %v521 = vmul.f32 %v265, %v265
        %v522 = vmul.f32 %v266, %v266
        %v523 = vmul.f32 %v267, %v267
        %v524 = vmul.f32 %v268, %v268
        %v525 = vmul.f32 %v269, %v269
        %v526 = vmul.f32 %v270, %v270
        %v527 = vmul.f32 %v271, %v271
        %v528 = vmul.f32 %v272, %v272
        %v529 = vmul.f32 %v273, %v273
        %v530 = vmul.f32 %v274, %v274
        %v531 = vmul.f32 %v275, %v275
        %v532 = vmul.f32 %v276, %v276
        %v533 = vmul.f32 %v277, %v277
        %v534 = vmul.f32 %v278, %v278
        %v535 = vmul.f32 %v279, %v279
        %v536 = vmul.f32 %v280, %v280
        %v537 = vmul.f32 %v281, %v281
        %v538 = vmul.f32 %v282, %v282
        %v539 = vmul.f32 %v283, %v283
        %v540 = vmul.f32 %v284, %v284
        %v541 = vmul.f32 %v285, %v285
        %v542 = vmul.f32 %v286, %v286
        %v543 = vmul.f32 %v287, %v287
        %v544 = vmul.f32 %v288, %v288
        %v545 = vmul.f32 %v289, %v289
        %v546 = vmul.f32 %v290, %v290
        %v547 = vmul.f32 %v291, %v291
        %v548 = vmul.f32 %v292, %v292
        %v549 = vmul.f32 %v293, %v293
        %v550 = vmul.f32 %v294, %v294
        %v551 = vmul.f32 %v295, %v295
        %v552 = vmul.f32 %v296, %v296
        %v553 = vmul.f32 %v297, %v297
        %v554 = vmul.f32 %v298, %v298
        %v555 = vmul.f32 %v299, %v299
        %v556 = vmul.f32 %v300, %v300
        %v557 = vmul.f32 %v301, %v301
        %v558 = vmul.f32 %v302, %v302
        %v559 = vmul.f32 %v303, %v303
        %v560 = vmul.f32 %v304, %v304
        %v561 = vmul.f32 %v305, %v305
        %v562 = vmul.f32 %v306, %v306
        %v563 = vmul.f32 %v307, %v307
        %v564 = vmul.f32 %v308, %v308
        %v565 = vmul.f32 %v309, %v309
        %v566 = vmul.f32 %v310, %v310
        %v567 = vmul.f32 %v311, %v311
        %v568 = vmul.f32 %v312, %v312
        %v569 = vmul.f32 %v313, %v313
        %v570 = vmul.f32 %v314, %v314
        %v571 = vmul.f32 %v315, %v315
        %v572 = vmul.f32 %v316, %v316
        %v573 = vmul.f32 %v317, %v317
        %v574 = vmul.f32 %v318, %v318
        %v575 = vmul.f32 %v319, %v319
        %v576 = vmul.f32 %v320, %v320
        %v577 = vmul.f32 %v321, %v321
        %v578 = vmul.f32 %v322, %v322
        %v579 = vmul.f32 %v323, %v323
        %v580 = vmul.f32 %v324, %v324
        %v581 = vmul.f32 %v325, %v325
        %v582 = vmul.f32 %v326, %v326
        %v583 = vmul.f32 %v327, %v327
        %v584 = vmul.f32 %v328, %v328
        %v585 = vmul.f32 %v329, %v329
        %v586 = vmul.f32 %v330, %v330
        %v587 = vmul.f32 %v331, %v331
        %v588 = vmul.f32 %v332, %v332
        %v589 = vmul.f32 %v333, %v333
        %v590 = vmul.f32 %v334, %v334
        %v591 = vmul.f32 %v335, %v335
        %v592 = vmul.f32 %v336, %v336
        %v593 = vmul.f32 %v337, %v337
        %v594 = vmul.f32 %v338, %v338
        %v595 = vmul.f32 %v339, %v339
        %v596 = vmul.f32 %v340, %v340
        %v597 = vmul.f32 %v341, %v341
        %v598 = vmul.f32 %v342, %v342
        %v599 = vmul.f32 %v343, %v343
        %v600 = vmul.f32 %v344, %v344
        %v601 = vmul.f32 %v345, %v345
        %v602 = vmul.f32 %v346, %v346
        %v603 = vmul.f32 %v347, %v347
        %v604 = vmul.f32 %v348, %v348
        %v605 = vmul.f32 %v349, %v349
        %v606 = vmul.f32 %v350, %v350
        %v607 = vmul.f32 %v351, %v351
        %v608 = vmul.f32 %v352, %v352
        %v609 = vmul.f32 %v353, %v353
        %v610 = vmul.f32 %v354, %v354
        %v611 = vmul.f32 %v355, %v355
        %v612 = vmul.f32 %v356, %v356
        %v613 = vmul.f32 %v357, %v357
        %v614 = vmul.f32 %v358, %v358
        %v615 = vmul.f32 %v359, %v359
        %v616 = vmul.f32 %v360, %v360
        %v617 = vmul.f32 %v361, %v361
        %v618 = vmul.f32 %v362, %v362
        %v619 = vmul.f32 %v363, %v363
        %v620 = vmul.f32 %v364, %v364
        %v621 = vmul.f32 %v365, %v365
        %v622 = vmul.f32 %v366, %v366
        %v623 = vmul.f32 %v367, %v367
        %v624 = vmul.f32 %v368, %v368
        %v625 = vmul.f32 %v369, %v369
        %v626 = vmul.f32 %v370, %v370
        %v627 = vmul.f32 %v371, %v371
        %v628 = vmul.f32 %v372, %v372
        %v629 = vmul.f32 %v373, %v373
        %v630 = vmul.f32 %v374, %v374
        %v631 = vmul.f32 %v375, %v375
        %v632 = vmul.f32 %v376, %v376
        %v633 = vmul.f32 %v377, %v377
        %v634 = vmul.f32 %v378, %v378
        %v635 = vmul.f32 %v379, %v379
        %v636 = vmul.f32 %v380, %v380
        %v637 = vmul.f32 %v381, %v381
        %v638 = vmul.f32 %v382, %v382
        %v639 = vmul.f32 %v383, %v383
        %v640 = vmul.f32 %v384, %v384
        %v641 = vmul.f32 %v385, %v385
        %v642 = vmul.f32 %v386, %v386
        %v643 = vmul.f32 %v387, %v387
        %v644 = vmul.f32 %v388, %v388
        %v645 = vmul.f32 %v389, %v389
        %v646 = vmul.f32 %v390, %v390
        %v647 = vmul.f32 %v391, %v391
        %v648 = vmul.f32 %v392, %v392
        %v649 = vmul.f32 %v393, %v393
        %v650 = vmul.f32 %v394, %v394
        %v651 = vmul.f32 %v395, %v395
        %v652 = vmul.f32 %v396, %v396
        %v653 = vmul.f32 %v397, %v397
        %v654 = vmul.f32 %v398, %v398
        %v655 = vmul.f32 %v399, %v399
        %v656 = vmul.f32 %v400, %v400
        %v657 = vmul.f32 %v401, %v401
        %v658 = vmul.f32 %v402, %v402
        %v659 = vmul.f32 %v403, %v403
        %v660 = vmul.f32 %v404, %v404
        %v661 = vmul.f32 %v405, %v405
        %v662 = vmul.f32 %v406, %v406
        %v663 = vmul.f32 %v407, %v407
        %v664 = vmul.f32 %v408, %v408
        %v665 = vmul.f32 %v409, %v409
        %v666 = vmul.f32 %v410, %v410
        %v667 = vmul.f32 %v411, %v411
        %v668 = vmul.f32 %v412, %v412
        %v669 = vmul.f32 %v413, %v413
        %v670 = vmul.f32 %v414, %v414
        %v671 = vmul.f32 %v415, %v415
        %v672 = vmul.f32 %v416, %v416
        %v673 = vmul.f32 %v417, %v417
        %v674 = vmul.f32 %v418, %v418
        %v675 = vmul.f32 %v419, %v419
        %v676 = vmul.f32 %v420, %v420
        %v677 = vmul.f32 %v421, %v421
        %v678 = vmul.f32 %v422, %v422
        %v679 = vmul.f32 %v423, %v423
        %v680 = vmul.f32 %v424, %v424
        %v681 = vmul.f32 %v425, %v425
        %v682 = vmul.f32 %v426, %v426
        %v683 = vmul.f32 %v427, %v427
        %v684 = vmul.f32 %v428, %v428
        %v685 = vmul.f32 %v429, %v429
        %v686 = vmul.f32 %v430, %v430
        %v687 = vmul.f32 %v431, %v431
        %v688 = vmul.f32 %v432, %v432
        %v689 = vmul.f32 %v433, %v433
        %v690 = vmul.f32 %v434, %v434
        %v691 = vmul.f32 %v435, %v435
        %v692 = vmul.f32 %v436, %v436
        %v693 = vmul.f32 %v437, %v437
        %v694 = vmul.f32 %v438, %v438
        %v695 = vmul.f32 %v439, %v439
        %v696 = vmul.f32 %v440, %v440
        %v697 = vmul.f32 %v441, %v441
        %v698 = vmul.f32 %v442, %v442
        %v699 = vmul.f32 %v443, %v443
        %v700 = vmul.f32 %v444, %v444
        %v701 = vmul.f32 %v445, %v445
        %v702 = vmul.f32 %v446, %v446
        %v703 = vmul.f32 %v447, %v447
        %v704 = vmul.f32 %v448, %v448
        %v705 = vmul.f32 %v449, %v449
        %v706 = vmul.f32 %v450, %v450
        %v707 = vmul.f32 %v451, %v451
        %v708 = vmul.f32 %v452, %v452
        %v709 = vmul.f32 %v453, %v453
        %v710 = vmul.f32 %v454, %v454
        %v711 = vmul.f32 %v455, %v455
        %v712 = vmul.f32 %v456, %v456
        %v713 = vmul.f32 %v457, %v457
        %v714 = vmul.f32 %v458, %v458
        %v715 = vmul.f32 %v459, %v459
        %716 = vadd.xlane.f32.xlu0 %v460
        %v717 = vpop.xlane.xlu0 %716
        %718 = vadd.xlane.f32.xlu0 %v461
        %v719 = vpop.xlane.xlu0 %718
        %720 = vadd.xlane.f32.xlu0 %v462
        %v721 = vpop.xlane.xlu0 %720
        %722 = vadd.xlane.f32.xlu0 %v463
        %v723 = vpop.xlane.xlu0 %722
        %724 = vadd.xlane.f32.xlu0 %v464
        %v725 = vpop.xlane.xlu0 %724
        %726 = vadd.xlane.f32.xlu0 %v465
        %v727 = vpop.xlane.xlu0 %726
        %728 = vadd.xlane.f32.xlu0 %v466
        %v729 = vpop.xlane.xlu0 %728
        %730 = vadd.xlane.f32.xlu0 %v467
        %v731 = vpop.xlane.xlu0 %730
        %732 = vadd.xlane.f32.xlu0 %v468
        %v733 = vpop.xlane.xlu0 %732
        %734 = vadd.xlane.f32.xlu0 %v469
        %v735 = vpop.xlane.xlu0 %734
        %736 = vadd.xlane.f32.xlu0 %v470
        %v737 = vpop.xlane.xlu0 %736
        %738 = vadd.xlane.f32.xlu0 %v471
        %v739 = vpop.xlane.xlu0 %738
        %740 = vadd.xlane.f32.xlu0 %v472
        %v741 = vpop.xlane.xlu0 %740
        %742 = vadd.xlane.f32.xlu0 %v473
        %v743 = vpop.xlane.xlu0 %742
        %744 = vadd.xlane.f32.xlu0 %v474
        %v745 = vpop.xlane.xlu0 %744
        %746 = vadd.xlane.f32.xlu0 %v475
        %v747 = vpop.xlane.xlu0 %746
        %748 = vadd.xlane.f32.xlu0 %v476
        %v749 = vpop.xlane.xlu0 %748
        %750 = vadd.xlane.f32.xlu0 %v477
        %v751 = vpop.xlane.xlu0 %750
        %752 = vadd.xlane.f32.xlu0 %v478
        %v753 = vpop.xlane.xlu0 %752
        %754 = vadd.xlane.f32.xlu0 %v479
        %v755 = vpop.xlane.xlu0 %754
        %756 = vadd.xlane.f32.xlu0 %v480
        %v757 = vpop.xlane.xlu0 %756
        %758 = vadd.xlane.f32.xlu0 %v481
        %v759 = vpop.xlane.xlu0 %758
        %760 = vadd.xlane.f32.xlu0 %v482
        %v761 = vpop.xlane.xlu0 %760
        %762 = vadd.xlane.f32.xlu0 %v483
        %v763 = vpop.xlane.xlu0 %762
        %764 = vadd.xlane.f32.xlu0 %v484
        %v765 = vpop.xlane.xlu0 %764
        %766 = vadd.xlane.f32.xlu0 %v485
        %v767 = vpop.xlane.xlu0 %766
        %768 = vadd.xlane.f32.xlu0 %v486
        %v769 = vpop.xlane.xlu0 %768
        %770 = vadd.xlane.f32.xlu0 %v487
        %v771 = vpop.xlane.xlu0 %770
        %772 = vadd.xlane.f32.xlu0 %v488
        %v773 = vpop.xlane.xlu0 %772
        %774 = vadd.xlane.f32.xlu0 %v489
        %v775 = vpop.xlane.xlu0 %774
        %776 = vadd.xlane.f32.xlu0 %v490
        %v777 = vpop.xlane.xlu0 %776
        %778 = vadd.xlane.f32.xlu0 %v491
        %v779 = vpop.xlane.xlu0 %778
        %780 = vadd.xlane.f32.xlu0 %v492
        %v781 = vpop.xlane.xlu0 %780
        %782 = vadd.xlane.f32.xlu0 %v493
        %v783 = vpop.xlane.xlu0 %782
        %784 = vadd.xlane.f32.xlu0 %v494
        %v785 = vpop.xlane.xlu0 %784
        %786 = vadd.xlane.f32.xlu0 %v495
        %v787 = vpop.xlane.xlu0 %786
        %788 = vadd.xlane.f32.xlu0 %v496
        %v789 = vpop.xlane.xlu0 %788
        %790 = vadd.xlane.f32.xlu0 %v497
        %v791 = vpop.xlane.xlu0 %790
        %792 = vadd.xlane.f32.xlu0 %v498
        %v793 = vpop.xlane.xlu0 %792
        %794 = vadd.xlane.f32.xlu0 %v499
        %v795 = vpop.xlane.xlu0 %794
        %796 = vadd.xlane.f32.xlu0 %v500
        %v797 = vpop.xlane.xlu0 %796
        %798 = vadd.xlane.f32.xlu0 %v501
        %v799 = vpop.xlane.xlu0 %798
        %800 = vadd.xlane.f32.xlu0 %v502
        %v801 = vpop.xlane.xlu0 %800
        %802 = vadd.xlane.f32.xlu0 %v503
        %v803 = vpop.xlane.xlu0 %802
        %804 = vadd.xlane.f32.xlu0 %v504
        %v805 = vpop.xlane.xlu0 %804
        %806 = vadd.xlane.f32.xlu0 %v505
        %v807 = vpop.xlane.xlu0 %806
        %808 = vadd.xlane.f32.xlu0 %v506
        %v809 = vpop.xlane.xlu0 %808
        %810 = vadd.xlane.f32.xlu0 %v507
        %v811 = vpop.xlane.xlu0 %810
        %812 = vadd.xlane.f32.xlu0 %v508
        %v813 = vpop.xlane.xlu0 %812
        %814 = vadd.xlane.f32.xlu0 %v509
        %v815 = vpop.xlane.xlu0 %814
        %816 = vadd.xlane.f32.xlu0 %v510
        %v817 = vpop.xlane.xlu0 %816
        %818 = vadd.xlane.f32.xlu0 %v511
        %v819 = vpop.xlane.xlu0 %818
        %820 = vadd.xlane.f32.xlu0 %v512
        %v821 = vpop.xlane.xlu0 %820
        %822 = vadd.xlane.f32.xlu0 %v513
        %v823 = vpop.xlane.xlu0 %822
        %824 = vadd.xlane.f32.xlu0 %v514
        %v825 = vpop.xlane.xlu0 %824
        %826 = vadd.xlane.f32.xlu0 %v515
        %v827 = vpop.xlane.xlu0 %826
        %828 = vadd.xlane.f32.xlu0 %v516
        %v829 = vpop.xlane.xlu0 %828
        %830 = vadd.xlane.f32.xlu0 %v517
        %v831 = vpop.xlane.xlu0 %830
        %832 = vadd.xlane.f32.xlu0 %v518
        %v833 = vpop.xlane.xlu0 %832
        %834 = vadd.xlane.f32.xlu0 %v519
        %v835 = vpop.xlane.xlu0 %834
        %836 = vadd.xlane.f32.xlu0 %v520
        %v837 = vpop.xlane.xlu0 %836
        %838 = vadd.xlane.f32.xlu0 %v521
        %v839 = vpop.xlane.xlu0 %838
        %840 = vadd.xlane.f32.xlu0 %v522
        %v841 = vpop.xlane.xlu0 %840
        %842 = vadd.xlane.f32.xlu0 %v523
        %v843 = vpop.xlane.xlu0 %842
        %844 = vadd.xlane.f32.xlu0 %v524
        %v845 = vpop.xlane.xlu0 %844
        %846 = vadd.xlane.f32.xlu0 %v525
        %v847 = vpop.xlane.xlu0 %846
        %848 = vadd.xlane.f32.xlu0 %v526
        %v849 = vpop.xlane.xlu0 %848
        %850 = vadd.xlane.f32.xlu0 %v527
        %v851 = vpop.xlane.xlu0 %850
        %852 = vadd.xlane.f32.xlu0 %v528
        %v853 = vpop.xlane.xlu0 %852
        %854 = vadd.xlane.f32.xlu0 %v529
        %v855 = vpop.xlane.xlu0 %854
        %856 = vadd.xlane.f32.xlu0 %v530
        %v857 = vpop.xlane.xlu0 %856
        %858 = vadd.xlane.f32.xlu0 %v531
        %v859 = vpop.xlane.xlu0 %858
        %860 = vadd.xlane.f32.xlu0 %v532
        %v861 = vpop.xlane.xlu0 %860
        %862 = vadd.xlane.f32.xlu0 %v533
        %v863 = vpop.xlane.xlu0 %862
        %864 = vadd.xlane.f32.xlu0 %v534
        %v865 = vpop.xlane.xlu0 %864
        %866 = vadd.xlane.f32.xlu0 %v535
        %v867 = vpop.xlane.xlu0 %866
        %868 = vadd.xlane.f32.xlu0 %v536
        %v869 = vpop.xlane.xlu0 %868
        %870 = vadd.xlane.f32.xlu0 %v537
        %v871 = vpop.xlane.xlu0 %870
        %872 = vadd.xlane.f32.xlu0 %v538
        %v873 = vpop.xlane.xlu0 %872
        %874 = vadd.xlane.f32.xlu0 %v539
        %v875 = vpop.xlane.xlu0 %874
        %876 = vadd.xlane.f32.xlu0 %v540
        %v877 = vpop.xlane.xlu0 %876
        %878 = vadd.xlane.f32.xlu0 %v541
        %v879 = vpop.xlane.xlu0 %878
        %880 = vadd.xlane.f32.xlu0 %v542
        %v881 = vpop.xlane.xlu0 %880
        %882 = vadd.xlane.f32.xlu0 %v543
        %v883 = vpop.xlane.xlu0 %882
        %884 = vadd.xlane.f32.xlu0 %v544
        %v885 = vpop.xlane.xlu0 %884
        %886 = vadd.xlane.f32.xlu0 %v545
        %v887 = vpop.xlane.xlu0 %886
        %888 = vadd.xlane.f32.xlu0 %v546
        %v889 = vpop.xlane.xlu0 %888
        %890 = vadd.xlane.f32.xlu0 %v547
        %v891 = vpop.xlane.xlu0 %890
        %892 = vadd.xlane.f32.xlu0 %v548
        %v893 = vpop.xlane.xlu0 %892
        %894 = vadd.xlane.f32.xlu0 %v549
        %v895 = vpop.xlane.xlu0 %894
        %896 = vadd.xlane.f32.xlu0 %v550
        %v897 = vpop.xlane.xlu0 %896
        %898 = vadd.xlane.f32.xlu0 %v551
        %v899 = vpop.xlane.xlu0 %898
        %900 = vadd.xlane.f32.xlu0 %v552
        %v901 = vpop.xlane.xlu0 %900
        %902 = vadd.xlane.f32.xlu0 %v553
        %v903 = vpop.xlane.xlu0 %902
        %904 = vadd.xlane.f32.xlu0 %v554
        %v905 = vpop.xlane.xlu0 %904
        %906 = vadd.xlane.f32.xlu0 %v555
        %v907 = vpop.xlane.xlu0 %906
        %908 = vadd.xlane.f32.xlu0 %v556
        %v909 = vpop.xlane.xlu0 %908
        %910 = vadd.xlane.f32.xlu0 %v557
        %v911 = vpop.xlane.xlu0 %910
        %912 = vadd.xlane.f32.xlu0 %v558
        %v913 = vpop.xlane.xlu0 %912
        %914 = vadd.xlane.f32.xlu0 %v559
        %v915 = vpop.xlane.xlu0 %914
        %916 = vadd.xlane.f32.xlu0 %v560
        %v917 = vpop.xlane.xlu0 %916
        %918 = vadd.xlane.f32.xlu0 %v561
        %v919 = vpop.xlane.xlu0 %918
        %920 = vadd.xlane.f32.xlu0 %v562
        %v921 = vpop.xlane.xlu0 %920
        %922 = vadd.xlane.f32.xlu0 %v563
        %v923 = vpop.xlane.xlu0 %922
        %924 = vadd.xlane.f32.xlu0 %v564
        %v925 = vpop.xlane.xlu0 %924
        %926 = vadd.xlane.f32.xlu0 %v565
        %v927 = vpop.xlane.xlu0 %926
        %928 = vadd.xlane.f32.xlu0 %v566
        %v929 = vpop.xlane.xlu0 %928
        %930 = vadd.xlane.f32.xlu0 %v567
        %v931 = vpop.xlane.xlu0 %930
        %932 = vadd.xlane.f32.xlu0 %v568
        %v933 = vpop.xlane.xlu0 %932
        %934 = vadd.xlane.f32.xlu0 %v569
        %v935 = vpop.xlane.xlu0 %934
        %936 = vadd.xlane.f32.xlu0 %v570
        %v937 = vpop.xlane.xlu0 %936
        %938 = vadd.xlane.f32.xlu0 %v571
        %v939 = vpop.xlane.xlu0 %938
        %940 = vadd.xlane.f32.xlu0 %v572
        %v941 = vpop.xlane.xlu0 %940
        %942 = vadd.xlane.f32.xlu0 %v573
        %v943 = vpop.xlane.xlu0 %942
        %944 = vadd.xlane.f32.xlu0 %v574
        %v945 = vpop.xlane.xlu0 %944
        %946 = vadd.xlane.f32.xlu0 %v575
        %v947 = vpop.xlane.xlu0 %946
        %948 = vadd.xlane.f32.xlu0 %v576
        %v949 = vpop.xlane.xlu0 %948
        %950 = vadd.xlane.f32.xlu0 %v577
        %v951 = vpop.xlane.xlu0 %950
        %952 = vadd.xlane.f32.xlu0 %v578
        %v953 = vpop.xlane.xlu0 %952
        %954 = vadd.xlane.f32.xlu0 %v579
        %v955 = vpop.xlane.xlu0 %954
        %956 = vadd.xlane.f32.xlu0 %v580
        %v957 = vpop.xlane.xlu0 %956
        %958 = vadd.xlane.f32.xlu0 %v581
        %v959 = vpop.xlane.xlu0 %958
        %960 = vadd.xlane.f32.xlu0 %v582
        %v961 = vpop.xlane.xlu0 %960
        %962 = vadd.xlane.f32.xlu0 %v583
        %v963 = vpop.xlane.xlu0 %962
        %964 = vadd.xlane.f32.xlu0 %v584
        %v965 = vpop.xlane.xlu0 %964
        %966 = vadd.xlane.f32.xlu0 %v585
        %v967 = vpop.xlane.xlu0 %966
        %968 = vadd.xlane.f32.xlu0 %v586
        %v969 = vpop.xlane.xlu0 %968
        %970 = vadd.xlane.f32.xlu0 %v587
        %v971 = vpop.xlane.xlu0 %970
        %972 = vadd.xlane.f32.xlu0 %v588
        %v973 = vpop.xlane.xlu0 %972
        %974 = vadd.xlane.f32.xlu0 %v589
        %v975 = vpop.xlane.xlu0 %974
        %976 = vadd.xlane.f32.xlu0 %v590
        %v977 = vpop.xlane.xlu0 %976
        %978 = vadd.xlane.f32.xlu0 %v591
        %v979 = vpop.xlane.xlu0 %978
        %980 = vadd.xlane.f32.xlu0 %v592
        %v981 = vpop.xlane.xlu0 %980
        %982 = vadd.xlane.f32.xlu0 %v593
        %v983 = vpop.xlane.xlu0 %982
        %984 = vadd.xlane.f32.xlu0 %v594
        %v985 = vpop.xlane.xlu0 %984
        %986 = vadd.xlane.f32.xlu0 %v595
        %v987 = vpop.xlane.xlu0 %986
        %988 = vadd.xlane.f32.xlu0 %v596
        %v989 = vpop.xlane.xlu0 %988
        %990 = vadd.xlane.f32.xlu0 %v597
        %v991 = vpop.xlane.xlu0 %990
        %992 = vadd.xlane.f32.xlu0 %v598
        %v993 = vpop.xlane.xlu0 %992
        %994 = vadd.xlane.f32.xlu0 %v599
        %v995 = vpop.xlane.xlu0 %994
        %996 = vadd.xlane.f32.xlu0 %v600
        %v997 = vpop.xlane.xlu0 %996
        %998 = vadd.xlane.f32.xlu0 %v601
        %v999 = vpop.xlane.xlu0 %998
        %1000 = vadd.xlane.f32.xlu0 %v602
        %v1001 = vpop.xlane.xlu0 %1000
        %1002 = vadd.xlane.f32.xlu0 %v603
        %v1003 = vpop.xlane.xlu0 %1002
        %1004 = vadd.xlane.f32.xlu0 %v604
        %v1005 = vpop.xlane.xlu0 %1004
        %1006 = vadd.xlane.f32.xlu0 %v605
        %v1007 = vpop.xlane.xlu0 %1006
        %1008 = vadd.xlane.f32.xlu0 %v606
        %v1009 = vpop.xlane.xlu0 %1008
        %1010 = vadd.xlane.f32.xlu0 %v607
        %v1011 = vpop.xlane.xlu0 %1010
        %1012 = vadd.xlane.f32.xlu0 %v608
        %v1013 = vpop.xlane.xlu0 %1012
        %1014 = vadd.xlane.f32.xlu0 %v609
        %v1015 = vpop.xlane.xlu0 %1014
        %1016 = vadd.xlane.f32.xlu0 %v610
        %v1017 = vpop.xlane.xlu0 %1016
        %1018 = vadd.xlane.f32.xlu0 %v611
        %v1019 = vpop.xlane.xlu0 %1018
        %1020 = vadd.xlane.f32.xlu0 %v612
        %v1021 = vpop.xlane.xlu0 %1020
        %1022 = vadd.xlane.f32.xlu0 %v613
        %v1023 = vpop.xlane.xlu0 %1022
        %1024 = vadd.xlane.f32.xlu0 %v614
        %v1025 = vpop.xlane.xlu0 %1024
        %1026 = vadd.xlane.f32.xlu0 %v615
        %v1027 = vpop.xlane.xlu0 %1026
        %1028 = vadd.xlane.f32.xlu0 %v616
        %v1029 = vpop.xlane.xlu0 %1028
        %1030 = vadd.xlane.f32.xlu0 %v617
        %v1031 = vpop.xlane.xlu0 %1030
        %1032 = vadd.xlane.f32.xlu0 %v618
        %v1033 = vpop.xlane.xlu0 %1032
        %1034 = vadd.xlane.f32.xlu0 %v619
        %v1035 = vpop.xlane.xlu0 %1034
        %1036 = vadd.xlane.f32.xlu0 %v620
        %v1037 = vpop.xlane.xlu0 %1036
        %1038 = vadd.xlane.f32.xlu0 %v621
        %v1039 = vpop.xlane.xlu0 %1038
        %1040 = vadd.xlane.f32.xlu0 %v622
        %v1041 = vpop.xlane.xlu0 %1040
        %1042 = vadd.xlane.f32.xlu0 %v623
        %v1043 = vpop.xlane.xlu0 %1042
        %1044 = vadd.xlane.f32.xlu0 %v624
        %v1045 = vpop.xlane.xlu0 %1044
        %1046 = vadd.xlane.f32.xlu0 %v625
        %v1047 = vpop.xlane.xlu0 %1046
        %1048 = vadd.xlane.f32.xlu0 %v626
        %v1049 = vpop.xlane.xlu0 %1048
        %1050 = vadd.xlane.f32.xlu0 %v627
        %v1051 = vpop.xlane.xlu0 %1050
        %1052 = vadd.xlane.f32.xlu0 %v628
        %v1053 = vpop.xlane.xlu0 %1052
        %1054 = vadd.xlane.f32.xlu0 %v629
        %v1055 = vpop.xlane.xlu0 %1054
        %1056 = vadd.xlane.f32.xlu0 %v630
        %v1057 = vpop.xlane.xlu0 %1056
        %1058 = vadd.xlane.f32.xlu0 %v631
        %v1059 = vpop.xlane.xlu0 %1058
        %1060 = vadd.xlane.f32.xlu0 %v632
        %v1061 = vpop.xlane.xlu0 %1060
        %1062 = vadd.xlane.f32.xlu0 %v633
        %v1063 = vpop.xlane.xlu0 %1062
        %1064 = vadd.xlane.f32.xlu0 %v634
        %v1065 = vpop.xlane.xlu0 %1064
        %1066 = vadd.xlane.f32.xlu0 %v635
        %v1067 = vpop.xlane.xlu0 %1066
        %1068 = vadd.xlane.f32.xlu0 %v636
        %v1069 = vpop.xlane.xlu0 %1068
        %1070 = vadd.xlane.f32.xlu0 %v637
        %v1071 = vpop.xlane.xlu0 %1070
        %1072 = vadd.xlane.f32.xlu0 %v638
        %v1073 = vpop.xlane.xlu0 %1072
        %1074 = vadd.xlane.f32.xlu0 %v639
        %v1075 = vpop.xlane.xlu0 %1074
        %1076 = vadd.xlane.f32.xlu0 %v640
        %v1077 = vpop.xlane.xlu0 %1076
        %1078 = vadd.xlane.f32.xlu0 %v641
        %v1079 = vpop.xlane.xlu0 %1078
        %1080 = vadd.xlane.f32.xlu0 %v642
        %v1081 = vpop.xlane.xlu0 %1080
        %1082 = vadd.xlane.f32.xlu0 %v643
        %v1083 = vpop.xlane.xlu0 %1082
        %1084 = vadd.xlane.f32.xlu0 %v644
        %v1085 = vpop.xlane.xlu0 %1084
        %1086 = vadd.xlane.f32.xlu0 %v645
        %v1087 = vpop.xlane.xlu0 %1086
        %1088 = vadd.xlane.f32.xlu0 %v646
        %v1089 = vpop.xlane.xlu0 %1088
        %1090 = vadd.xlane.f32.xlu0 %v647
        %v1091 = vpop.xlane.xlu0 %1090
        %1092 = vadd.xlane.f32.xlu0 %v648
        %v1093 = vpop.xlane.xlu0 %1092
        %1094 = vadd.xlane.f32.xlu0 %v649
        %v1095 = vpop.xlane.xlu0 %1094
        %1096 = vadd.xlane.f32.xlu0 %v650
        %v1097 = vpop.xlane.xlu0 %1096
        %1098 = vadd.xlane.f32.xlu0 %v651
        %v1099 = vpop.xlane.xlu0 %1098
        %1100 = vadd.xlane.f32.xlu0 %v652
        %v1101 = vpop.xlane.xlu0 %1100
        %1102 = vadd.xlane.f32.xlu0 %v653
        %v1103 = vpop.xlane.xlu0 %1102
        %1104 = vadd.xlane.f32.xlu0 %v654
        %v1105 = vpop.xlane.xlu0 %1104
        %1106 = vadd.xlane.f32.xlu0 %v655
        %v1107 = vpop.xlane.xlu0 %1106
        %1108 = vadd.xlane.f32.xlu0 %v656
        %v1109 = vpop.xlane.xlu0 %1108
        %1110 = vadd.xlane.f32.xlu0 %v657
        %v1111 = vpop.xlane.xlu0 %1110
        %1112 = vadd.xlane.f32.xlu0 %v658
        %v1113 = vpop.xlane.xlu0 %1112
        %1114 = vadd.xlane.f32.xlu0 %v659
        %v1115 = vpop.xlane.xlu0 %1114
        %1116 = vadd.xlane.f32.xlu0 %v660
        %v1117 = vpop.xlane.xlu0 %1116
        %1118 = vadd.xlane.f32.xlu0 %v661
        %v1119 = vpop.xlane.xlu0 %1118
        %1120 = vadd.xlane.f32.xlu0 %v662
        %v1121 = vpop.xlane.xlu0 %1120
        %1122 = vadd.xlane.f32.xlu0 %v663
        %v1123 = vpop.xlane.xlu0 %1122
        %1124 = vadd.xlane.f32.xlu0 %v664
        %v1125 = vpop.xlane.xlu0 %1124
        %1126 = vadd.xlane.f32.xlu0 %v665
        %v1127 = vpop.xlane.xlu0 %1126
        %1128 = vadd.xlane.f32.xlu0 %v666
        %v1129 = vpop.xlane.xlu0 %1128
        %1130 = vadd.xlane.f32.xlu0 %v667
        %v1131 = vpop.xlane.xlu0 %1130
        %1132 = vadd.xlane.f32.xlu0 %v668
        %v1133 = vpop.xlane.xlu0 %1132
        %1134 = vadd.xlane.f32.xlu0 %v669
        %v1135 = vpop.xlane.xlu0 %1134
        %1136 = vadd.xlane.f32.xlu0 %v670
        %v1137 = vpop.xlane.xlu0 %1136
        %1138 = vadd.xlane.f32.xlu0 %v671
        %v1139 = vpop.xlane.xlu0 %1138
        %1140 = vadd.xlane.f32.xlu0 %v672
        %v1141 = vpop.xlane.xlu0 %1140
        %1142 = vadd.xlane.f32.xlu0 %v673
        %v1143 = vpop.xlane.xlu0 %1142
        %1144 = vadd.xlane.f32.xlu0 %v674
        %v1145 = vpop.xlane.xlu0 %1144
        %1146 = vadd.xlane.f32.xlu0 %v675
        %v1147 = vpop.xlane.xlu0 %1146
        %1148 = vadd.xlane.f32.xlu0 %v676
        %v1149 = vpop.xlane.xlu0 %1148
        %1150 = vadd.xlane.f32.xlu0 %v677
        %v1151 = vpop.xlane.xlu0 %1150
        %1152 = vadd.xlane.f32.xlu0 %v678
        %v1153 = vpop.xlane.xlu0 %1152
        %1154 = vadd.xlane.f32.xlu0 %v679
        %v1155 = vpop.xlane.xlu0 %1154
        %1156 = vadd.xlane.f32.xlu0 %v680
        %v1157 = vpop.xlane.xlu0 %1156
        %1158 = vadd.xlane.f32.xlu0 %v681
        %v1159 = vpop.xlane.xlu0 %1158
        %1160 = vadd.xlane.f32.xlu0 %v682
        %v1161 = vpop.xlane.xlu0 %1160
        %1162 = vadd.xlane.f32.xlu0 %v683
        %v1163 = vpop.xlane.xlu0 %1162
        %1164 = vadd.xlane.f32.xlu0 %v684
        %v1165 = vpop.xlane.xlu0 %1164
        %1166 = vadd.xlane.f32.xlu0 %v685
        %v1167 = vpop.xlane.xlu0 %1166
        %1168 = vadd.xlane.f32.xlu0 %v686
        %v1169 = vpop.xlane.xlu0 %1168
        %1170 = vadd.xlane.f32.xlu0 %v687
        %v1171 = vpop.xlane.xlu0 %1170
        %1172 = vadd.xlane.f32.xlu0 %v688
        %v1173 = vpop.xlane.xlu0 %1172
        %1174 = vadd.xlane.f32.xlu0 %v689
        %v1175 = vpop.xlane.xlu0 %1174
        %1176 = vadd.xlane.f32.xlu0 %v690
        %v1177 = vpop.xlane.xlu0 %1176
        %1178 = vadd.xlane.f32.xlu0 %v691
        %v1179 = vpop.xlane.xlu0 %1178
        %1180 = vadd.xlane.f32.xlu0 %v692
        %v1181 = vpop.xlane.xlu0 %1180
        %1182 = vadd.xlane.f32.xlu0 %v693
        %v1183 = vpop.xlane.xlu0 %1182
        %1184 = vadd.xlane.f32.xlu0 %v694
        %v1185 = vpop.xlane.xlu0 %1184
        %1186 = vadd.xlane.f32.xlu0 %v695
        %v1187 = vpop.xlane.xlu0 %1186
        %1188 = vadd.xlane.f32.xlu0 %v696
        %v1189 = vpop.xlane.xlu0 %1188
        %1190 = vadd.xlane.f32.xlu0 %v697
        %v1191 = vpop.xlane.xlu0 %1190
        %1192 = vadd.xlane.f32.xlu0 %v698
        %v1193 = vpop.xlane.xlu0 %1192
        %1194 = vadd.xlane.f32.xlu0 %v699
        %v1195 = vpop.xlane.xlu0 %1194
        %1196 = vadd.xlane.f32.xlu0 %v700
        %v1197 = vpop.xlane.xlu0 %1196
        %1198 = vadd.xlane.f32.xlu0 %v701
        %v1199 = vpop.xlane.xlu0 %1198
        %1200 = vadd.xlane.f32.xlu0 %v702
        %v1201 = vpop.xlane.xlu0 %1200
        %1202 = vadd.xlane.f32.xlu0 %v703
        %v1203 = vpop.xlane.xlu0 %1202
        %1204 = vadd.xlane.f32.xlu0 %v704
        %v1205 = vpop.xlane.xlu0 %1204
        %1206 = vadd.xlane.f32.xlu0 %v705
        %v1207 = vpop.xlane.xlu0 %1206
        %1208 = vadd.xlane.f32.xlu0 %v706
        %v1209 = vpop.xlane.xlu0 %1208
        %1210 = vadd.xlane.f32.xlu0 %v707
        %v1211 = vpop.xlane.xlu0 %1210
        %1212 = vadd.xlane.f32.xlu0 %v708
        %v1213 = vpop.xlane.xlu0 %1212
        %1214 = vadd.xlane.f32.xlu0 %v709
        %v1215 = vpop.xlane.xlu0 %1214
        %1216 = vadd.xlane.f32.xlu0 %v710
        %v1217 = vpop.xlane.xlu0 %1216
        %1218 = vadd.xlane.f32.xlu0 %v711
        %v1219 = vpop.xlane.xlu0 %1218
        %1220 = vadd.xlane.f32.xlu0 %v712
        %v1221 = vpop.xlane.xlu0 %1220
        %1222 = vadd.xlane.f32.xlu0 %v713
        %v1223 = vpop.xlane.xlu0 %1222
        %1224 = vadd.xlane.f32.xlu0 %v714
        %v1225 = vpop.xlane.xlu0 %1224
        %1226 = vadd.xlane.f32.xlu0 %v715
        %v1227 = vpop.xlane.xlu0 %1226
        %v1228 = vmax.f32 %v717, 1e-24
        %v1229 = vmax.f32 %v719, 1e-24
        %v1230 = vmax.f32 %v721, 1e-24
        %v1231 = vmax.f32 %v723, 1e-24
        %v1232 = vmax.f32 %v725, 1e-24
        %v1233 = vmax.f32 %v727, 1e-24
        %v1234 = vmax.f32 %v729, 1e-24
        %v1235 = vmax.f32 %v731, 1e-24
        %v1236 = vmax.f32 %v733, 1e-24
        %v1237 = vmax.f32 %v735, 1e-24
        %v1238 = vmax.f32 %v737, 1e-24
        %v1239 = vmax.f32 %v739, 1e-24
        %v1240 = vmax.f32 %v741, 1e-24
        %v1241 = vmax.f32 %v743, 1e-24
        %v1242 = vmax.f32 %v745, 1e-24
        %v1243 = vmax.f32 %v747, 1e-24
        %v1244 = vmax.f32 %v749, 1e-24
        %v1245 = vmax.f32 %v751, 1e-24
        %v1246 = vmax.f32 %v753, 1e-24
        %v1247 = vmax.f32 %v755, 1e-24
        %v1248 = vmax.f32 %v757, 1e-24
        %v1249 = vmax.f32 %v759, 1e-24
        %v1250 = vmax.f32 %v761, 1e-24
        %v1251 = vmax.f32 %v763, 1e-24
        %v1252 = vmax.f32 %v765, 1e-24
        %v1253 = vmax.f32 %v767, 1e-24
        %v1254 = vmax.f32 %v769, 1e-24
        %v1255 = vmax.f32 %v771, 1e-24
        %v1256 = vmax.f32 %v773, 1e-24
        %v1257 = vmax.f32 %v775, 1e-24
        %v1258 = vmax.f32 %v777, 1e-24
        %v1259 = vmax.f32 %v779, 1e-24
        %v1260 = vmax.f32 %v781, 1e-24
        %v1261 = vmax.f32 %v783, 1e-24
        %v1262 = vmax.f32 %v785, 1e-24
        %v1263 = vmax.f32 %v787, 1e-24
        %v1264 = vmax.f32 %v789, 1e-24
        %v1265 = vmax.f32 %v791, 1e-24
        %v1266 = vmax.f32 %v793, 1e-24
        %v1267 = vmax.f32 %v795, 1e-24
        %v1268 = vmax.f32 %v797, 1e-24
        %v1269 = vmax.f32 %v799, 1e-24
        %v1270 = vmax.f32 %v801, 1e-24
        %v1271 = vmax.f32 %v803, 1e-24
        %v1272 = vmax.f32 %v805, 1e-24
        %v1273 = vmax.f32 %v807, 1e-24
        %v1274 = vmax.f32 %v809, 1e-24
        %v1275 = vmax.f32 %v811, 1e-24
        %v1276 = vmax.f32 %v813, 1e-24
        %v1277 = vmax.f32 %v815, 1e-24
        %v1278 = vmax.f32 %v817, 1e-24
        %v1279 = vmax.f32 %v819, 1e-24
        %v1280 = vmax.f32 %v821, 1e-24
        %v1281 = vmax.f32 %v823, 1e-24
        %v1282 = vmax.f32 %v825, 1e-24
        %v1283 = vmax.f32 %v827, 1e-24
        %v1284 = vmax.f32 %v829, 1e-24
        %v1285 = vmax.f32 %v831, 1e-24
        %v1286 = vmax.f32 %v833, 1e-24
        %v1287 = vmax.f32 %v835, 1e-24
        %v1288 = vmax.f32 %v837, 1e-24
        %v1289 = vmax.f32 %v839, 1e-24
        %v1290 = vmax.f32 %v841, 1e-24
        %v1291 = vmax.f32 %v843, 1e-24
        %v1292 = vmax.f32 %v845, 1e-24
        %v1293 = vmax.f32 %v847, 1e-24
        %v1294 = vmax.f32 %v849, 1e-24
        %v1295 = vmax.f32 %v851, 1e-24
        %v1296 = vmax.f32 %v853, 1e-24
        %v1297 = vmax.f32 %v855, 1e-24
        %v1298 = vmax.f32 %v857, 1e-24
        %v1299 = vmax.f32 %v859, 1e-24
        %v1300 = vmax.f32 %v861, 1e-24
        %v1301 = vmax.f32 %v863, 1e-24
        %v1302 = vmax.f32 %v865, 1e-24
        %v1303 = vmax.f32 %v867, 1e-24
        %v1304 = vmax.f32 %v869, 1e-24
        %v1305 = vmax.f32 %v871, 1e-24
        %v1306 = vmax.f32 %v873, 1e-24
        %v1307 = vmax.f32 %v875, 1e-24
        %v1308 = vmax.f32 %v877, 1e-24
        %v1309 = vmax.f32 %v879, 1e-24
        %v1310 = vmax.f32 %v881, 1e-24
        %v1311 = vmax.f32 %v883, 1e-24
        %v1312 = vmax.f32 %v885, 1e-24
        %v1313 = vmax.f32 %v887, 1e-24
        %v1314 = vmax.f32 %v889, 1e-24
        %v1315 = vmax.f32 %v891, 1e-24
        %v1316 = vmax.f32 %v893, 1e-24
        %v1317 = vmax.f32 %v895, 1e-24
        %v1318 = vmax.f32 %v897, 1e-24
        %v1319 = vmax.f32 %v899, 1e-24
        %v1320 = vmax.f32 %v901, 1e-24
        %v1321 = vmax.f32 %v903, 1e-24
        %v1322 = vmax.f32 %v905, 1e-24
        %v1323 = vmax.f32 %v907, 1e-24
        %v1324 = vmax.f32 %v909, 1e-24
        %v1325 = vmax.f32 %v911, 1e-24
        %v1326 = vmax.f32 %v913, 1e-24
        %v1327 = vmax.f32 %v915, 1e-24
        %v1328 = vmax.f32 %v917, 1e-24
        %v1329 = vmax.f32 %v919, 1e-24
        %v1330 = vmax.f32 %v921, 1e-24
        %v1331 = vmax.f32 %v923, 1e-24
        %v1332 = vmax.f32 %v925, 1e-24
        %v1333 = vmax.f32 %v927, 1e-24
        %v1334 = vmax.f32 %v929, 1e-24
        %v1335 = vmax.f32 %v931, 1e-24
        %v1336 = vmax.f32 %v933, 1e-24
        %v1337 = vmax.f32 %v935, 1e-24
        %v1338 = vmax.f32 %v937, 1e-24
        %v1339 = vmax.f32 %v939, 1e-24
        %v1340 = vmax.f32 %v941, 1e-24
        %v1341 = vmax.f32 %v943, 1e-24
        %v1342 = vmax.f32 %v945, 1e-24
        %v1343 = vmax.f32 %v947, 1e-24
        %v1344 = vmax.f32 %v949, 1e-24
        %v1345 = vmax.f32 %v951, 1e-24
        %v1346 = vmax.f32 %v953, 1e-24
        %v1347 = vmax.f32 %v955, 1e-24
        %v1348 = vmax.f32 %v957, 1e-24
        %v1349 = vmax.f32 %v959, 1e-24
        %v1350 = vmax.f32 %v961, 1e-24
        %v1351 = vmax.f32 %v963, 1e-24
        %v1352 = vmax.f32 %v965, 1e-24
        %v1353 = vmax.f32 %v967, 1e-24
        %v1354 = vmax.f32 %v969, 1e-24
        %v1355 = vmax.f32 %v971, 1e-24
        %v1356 = vmax.f32 %v973, 1e-24
        %v1357 = vmax.f32 %v975, 1e-24
        %v1358 = vmax.f32 %v977, 1e-24
        %v1359 = vmax.f32 %v979, 1e-24
        %v1360 = vmax.f32 %v981, 1e-24
        %v1361 = vmax.f32 %v983, 1e-24
        %v1362 = vmax.f32 %v985, 1e-24
        %v1363 = vmax.f32 %v987, 1e-24
        %v1364 = vmax.f32 %v989, 1e-24
        %v1365 = vmax.f32 %v991, 1e-24
        %v1366 = vmax.f32 %v993, 1e-24
        %v1367 = vmax.f32 %v995, 1e-24
        %v1368 = vmax.f32 %v997, 1e-24
        %v1369 = vmax.f32 %v999, 1e-24
        %v1370 = vmax.f32 %v1001, 1e-24
        %v1371 = vmax.f32 %v1003, 1e-24
        %v1372 = vmax.f32 %v1005, 1e-24
        %v1373 = vmax.f32 %v1007, 1e-24
        %v1374 = vmax.f32 %v1009, 1e-24
        %v1375 = vmax.f32 %v1011, 1e-24
        %v1376 = vmax.f32 %v1013, 1e-24
        %v1377 = vmax.f32 %v1015, 1e-24
        %v1378 = vmax.f32 %v1017, 1e-24
        %v1379 = vmax.f32 %v1019, 1e-24
        %v1380 = vmax.f32 %v1021, 1e-24
        %v1381 = vmax.f32 %v1023, 1e-24
        %v1382 = vmax.f32 %v1025, 1e-24
        %v1383 = vmax.f32 %v1027, 1e-24
        %v1384 = vmax.f32 %v1029, 1e-24
        %v1385 = vmax.f32 %v1031, 1e-24
        %v1386 = vmax.f32 %v1033, 1e-24
        %v1387 = vmax.f32 %v1035, 1e-24
        %v1388 = vmax.f32 %v1037, 1e-24
        %v1389 = vmax.f32 %v1039, 1e-24
        %v1390 = vmax.f32 %v1041, 1e-24
        %v1391 = vmax.f32 %v1043, 1e-24
        %v1392 = vmax.f32 %v1045, 1e-24
        %v1393 = vmax.f32 %v1047, 1e-24
        %v1394 = vmax.f32 %v1049, 1e-24
        %v1395 = vmax.f32 %v1051, 1e-24
        %v1396 = vmax.f32 %v1053, 1e-24
        %v1397 = vmax.f32 %v1055, 1e-24
        %v1398 = vmax.f32 %v1057, 1e-24
        %v1399 = vmax.f32 %v1059, 1e-24
        %v1400 = vmax.f32 %v1061, 1e-24
        %v1401 = vmax.f32 %v1063, 1e-24
        %v1402 = vmax.f32 %v1065, 1e-24
        %v1403 = vmax.f32 %v1067, 1e-24
        %v1404 = vmax.f32 %v1069, 1e-24
        %v1405 = vmax.f32 %v1071, 1e-24
        %v1406 = vmax.f32 %v1073, 1e-24
        %v1407 = vmax.f32 %v1075, 1e-24
        %v1408 = vmax.f32 %v1077, 1e-24
        %v1409 = vmax.f32 %v1079, 1e-24
        %v1410 = vmax.f32 %v1081, 1e-24
        %v1411 = vmax.f32 %v1083, 1e-24
        %v1412 = vmax.f32 %v1085, 1e-24
        %v1413 = vmax.f32 %v1087, 1e-24
        %v1414 = vmax.f32 %v1089, 1e-24
        %v1415 = vmax.f32 %v1091, 1e-24
        %v1416 = vmax.f32 %v1093, 1e-24
        %v1417 = vmax.f32 %v1095, 1e-24
        %v1418 = vmax.f32 %v1097, 1e-24
        %v1419 = vmax.f32 %v1099, 1e-24
        %v1420 = vmax.f32 %v1101, 1e-24
        %v1421 = vmax.f32 %v1103, 1e-24
        %v1422 = vmax.f32 %v1105, 1e-24
        %v1423 = vmax.f32 %v1107, 1e-24
        %v1424 = vmax.f32 %v1109, 1e-24
        %v1425 = vmax.f32 %v1111, 1e-24
        %v1426 = vmax.f32 %v1113, 1e-24
        %v1427 = vmax.f32 %v1115, 1e-24
        %v1428 = vmax.f32 %v1117, 1e-24
        %v1429 = vmax.f32 %v1119, 1e-24
        %v1430 = vmax.f32 %v1121, 1e-24
        %v1431 = vmax.f32 %v1123, 1e-24
        %v1432 = vmax.f32 %v1125, 1e-24
        %v1433 = vmax.f32 %v1127, 1e-24
        %v1434 = vmax.f32 %v1129, 1e-24
        %v1435 = vmax.f32 %v1131, 1e-24
        %v1436 = vmax.f32 %v1133, 1e-24
        %v1437 = vmax.f32 %v1135, 1e-24
        %v1438 = vmax.f32 %v1137, 1e-24
        %v1439 = vmax.f32 %v1139, 1e-24
        %v1440 = vmax.f32 %v1141, 1e-24
        %v1441 = vmax.f32 %v1143, 1e-24
        %v1442 = vmax.f32 %v1145, 1e-24
        %v1443 = vmax.f32 %v1147, 1e-24
        %v1444 = vmax.f32 %v1149, 1e-24
        %v1445 = vmax.f32 %v1151, 1e-24
        %v1446 = vmax.f32 %v1153, 1e-24
        %v1447 = vmax.f32 %v1155, 1e-24
        %v1448 = vmax.f32 %v1157, 1e-24
        %v1449 = vmax.f32 %v1159, 1e-24
        %v1450 = vmax.f32 %v1161, 1e-24
        %v1451 = vmax.f32 %v1163, 1e-24
        %v1452 = vmax.f32 %v1165, 1e-24
        %v1453 = vmax.f32 %v1167, 1e-24
        %v1454 = vmax.f32 %v1169, 1e-24
        %v1455 = vmax.f32 %v1171, 1e-24
        %v1456 = vmax.f32 %v1173, 1e-24
        %v1457 = vmax.f32 %v1175, 1e-24
        %v1458 = vmax.f32 %v1177, 1e-24
        %v1459 = vmax.f32 %v1179, 1e-24
        %v1460 = vmax.f32 %v1181, 1e-24
        %v1461 = vmax.f32 %v1183, 1e-24
        %v1462 = vmax.f32 %v1185, 1e-24
        %v1463 = vmax.f32 %v1187, 1e-24
        %v1464 = vmax.f32 %v1189, 1e-24
        %v1465 = vmax.f32 %v1191, 1e-24
        %v1466 = vmax.f32 %v1193, 1e-24
        %v1467 = vmax.f32 %v1195, 1e-24
        %v1468 = vmax.f32 %v1197, 1e-24
        %v1469 = vmax.f32 %v1199, 1e-24
        %v1470 = vmax.f32 %v1201, 1e-24
        %v1471 = vmax.f32 %v1203, 1e-24
        %v1472 = vmax.f32 %v1205, 1e-24
        %v1473 = vmax.f32 %v1207, 1e-24
        %v1474 = vmax.f32 %v1209, 1e-24
        %v1475 = vmax.f32 %v1211, 1e-24
        %v1476 = vmax.f32 %v1213, 1e-24
        %v1477 = vmax.f32 %v1215, 1e-24
        %v1478 = vmax.f32 %v1217, 1e-24
        %v1479 = vmax.f32 %v1219, 1e-24
        %v1480 = vmax.f32 %v1221, 1e-24
        %v1481 = vmax.f32 %v1223, 1e-24
        %v1482 = vmax.f32 %v1225, 1e-24
        %v1483 = vmax.f32 %v1227, 1e-24
        %v1484 = vrsqrt.pop %v1228
        %v1485 = vrsqrt.pop %v1229
        %v1486 = vrsqrt.pop %v1230
        %v1487 = vrsqrt.pop %v1231
        %v1488 = vrsqrt.pop %v1232
        %v1489 = vrsqrt.pop %v1233
        %v1490 = vrsqrt.pop %v1234
        %v1491 = vrsqrt.pop %v1235
        %v1492 = vrsqrt.pop %v1236
        %v1493 = vrsqrt.pop %v1237
        %v1494 = vrsqrt.pop %v1238
        %v1495 = vrsqrt.pop %v1239
        %v1496 = vrsqrt.pop %v1240
        %v1497 = vrsqrt.pop %v1241
        %v1498 = vrsqrt.pop %v1242
        %v1499 = vrsqrt.pop %v1243
        %v1500 = vrsqrt.pop %v1244
        %v1501 = vrsqrt.pop %v1245
        %v1502 = vrsqrt.pop %v1246
        %v1503 = vrsqrt.pop %v1247
        %v1504 = vrsqrt.pop %v1248
        %v1505 = vrsqrt.pop %v1249
        %v1506 = vrsqrt.pop %v1250
        %v1507 = vrsqrt.pop %v1251
        %v1508 = vrsqrt.pop %v1252
        %v1509 = vrsqrt.pop %v1253
        %v1510 = vrsqrt.pop %v1254
        %v1511 = vrsqrt.pop %v1255
        %v1512 = vrsqrt.pop %v1256
        %v1513 = vrsqrt.pop %v1257
        %v1514 = vrsqrt.pop %v1258
        %v1515 = vrsqrt.pop %v1259
        %v1516 = vrsqrt.pop %v1260
        %v1517 = vrsqrt.pop %v1261
        %v1518 = vrsqrt.pop %v1262
        %v1519 = vrsqrt.pop %v1263
        %v1520 = vrsqrt.pop %v1264
        %v1521 = vrsqrt.pop %v1265
        %v1522 = vrsqrt.pop %v1266
        %v1523 = vrsqrt.pop %v1267
        %v1524 = vrsqrt.pop %v1268
        %v1525 = vrsqrt.pop %v1269
        %v1526 = vrsqrt.pop %v1270
        %v1527 = vrsqrt.pop %v1271
        %v1528 = vrsqrt.pop %v1272
        %v1529 = vrsqrt.pop %v1273
        %v1530 = vrsqrt.pop %v1274
        %v1531 = vrsqrt.pop %v1275
        %v1532 = vrsqrt.pop %v1276
        %v1533 = vrsqrt.pop %v1277
        %v1534 = vrsqrt.pop %v1278
        %v1535 = vrsqrt.pop %v1279
        %v1536 = vrsqrt.pop %v1280
        %v1537 = vrsqrt.pop %v1281
        %v1538 = vrsqrt.pop %v1282
        %v1539 = vrsqrt.pop %v1283
        %v1540 = vrsqrt.pop %v1284
        %v1541 = vrsqrt.pop %v1285
        %v1542 = vrsqrt.pop %v1286
        %v1543 = vrsqrt.pop %v1287
        %v1544 = vrsqrt.pop %v1288
        %v1545 = vrsqrt.pop %v1289
        %v1546 = vrsqrt.pop %v1290
        %v1547 = vrsqrt.pop %v1291
        %v1548 = vrsqrt.pop %v1292
        %v1549 = vrsqrt.pop %v1293
        %v1550 = vrsqrt.pop %v1294
        %v1551 = vrsqrt.pop %v1295
        %v1552 = vrsqrt.pop %v1296
        %v1553 = vrsqrt.pop %v1297
        %v1554 = vrsqrt.pop %v1298
        %v1555 = vrsqrt.pop %v1299
        %v1556 = vrsqrt.pop %v1300
        %v1557 = vrsqrt.pop %v1301
        %v1558 = vrsqrt.pop %v1302
        %v1559 = vrsqrt.pop %v1303
        %v1560 = vrsqrt.pop %v1304
        %v1561 = vrsqrt.pop %v1305
        %v1562 = vrsqrt.pop %v1306
        %v1563 = vrsqrt.pop %v1307
        %v1564 = vrsqrt.pop %v1308
        %v1565 = vrsqrt.pop %v1309
        %v1566 = vrsqrt.pop %v1310
        %v1567 = vrsqrt.pop %v1311
        %v1568 = vrsqrt.pop %v1312
        %v1569 = vrsqrt.pop %v1313
        %v1570 = vrsqrt.pop %v1314
        %v1571 = vrsqrt.pop %v1315
        %v1572 = vrsqrt.pop %v1316
        %v1573 = vrsqrt.pop %v1317
        %v1574 = vrsqrt.pop %v1318
        %v1575 = vrsqrt.pop %v1319
        %v1576 = vrsqrt.pop %v1320
        %v1577 = vrsqrt.pop %v1321
        %v1578 = vrsqrt.pop %v1322
        %v1579 = vrsqrt.pop %v1323
        %v1580 = vrsqrt.pop %v1324
        %v1581 = vrsqrt.pop %v1325
        %v1582 = vrsqrt.pop %v1326
        %v1583 = vrsqrt.pop %v1327
        %v1584 = vrsqrt.pop %v1328
        %v1585 = vrsqrt.pop %v1329
        %v1586 = vrsqrt.pop %v1330
        %v1587 = vrsqrt.pop %v1331
        %v1588 = vrsqrt.pop %v1332
        %v1589 = vrsqrt.pop %v1333
        %v1590 = vrsqrt.pop %v1334
        %v1591 = vrsqrt.pop %v1335
        %v1592 = vrsqrt.pop %v1336
        %v1593 = vrsqrt.pop %v1337
        %v1594 = vrsqrt.pop %v1338
        %v1595 = vrsqrt.pop %v1339
        %v1596 = vrsqrt.pop %v1340
        %v1597 = vrsqrt.pop %v1341
        %v1598 = vrsqrt.pop %v1342
        %v1599 = vrsqrt.pop %v1343
        %v1600 = vrsqrt.pop %v1344
        %v1601 = vrsqrt.pop %v1345
        %v1602 = vrsqrt.pop %v1346
        %v1603 = vrsqrt.pop %v1347
        %v1604 = vrsqrt.pop %v1348
        %v1605 = vrsqrt.pop %v1349
        %v1606 = vrsqrt.pop %v1350
        %v1607 = vrsqrt.pop %v1351
        %v1608 = vrsqrt.pop %v1352
        %v1609 = vrsqrt.pop %v1353
        %v1610 = vrsqrt.pop %v1354
        %v1611 = vrsqrt.pop %v1355
        %v1612 = vrsqrt.pop %v1356
        %v1613 = vrsqrt.pop %v1357
        %v1614 = vrsqrt.pop %v1358
        %v1615 = vrsqrt.pop %v1359
        %v1616 = vrsqrt.pop %v1360
        %v1617 = vrsqrt.pop %v1361
        %v1618 = vrsqrt.pop %v1362
        %v1619 = vrsqrt.pop %v1363
        %v1620 = vrsqrt.pop %v1364
        %v1621 = vrsqrt.pop %v1365
        %v1622 = vrsqrt.pop %v1366
        %v1623 = vrsqrt.pop %v1367
        %v1624 = vrsqrt.pop %v1368
        %v1625 = vrsqrt.pop %v1369
        %v1626 = vrsqrt.pop %v1370
        %v1627 = vrsqrt.pop %v1371
        %v1628 = vrsqrt.pop %v1372
        %v1629 = vrsqrt.pop %v1373
        %v1630 = vrsqrt.pop %v1374
        %v1631 = vrsqrt.pop %v1375
        %v1632 = vrsqrt.pop %v1376
        %v1633 = vrsqrt.pop %v1377
        %v1634 = vrsqrt.pop %v1378
        %v1635 = vrsqrt.pop %v1379
        %v1636 = vrsqrt.pop %v1380
        %v1637 = vrsqrt.pop %v1381
        %v1638 = vrsqrt.pop %v1382
        %v1639 = vrsqrt.pop %v1383
        %v1640 = vrsqrt.pop %v1384
        %v1641 = vrsqrt.pop %v1385
        %v1642 = vrsqrt.pop %v1386
        %v1643 = vrsqrt.pop %v1387
        %v1644 = vrsqrt.pop %v1388
        %v1645 = vrsqrt.pop %v1389
        %v1646 = vrsqrt.pop %v1390
        %v1647 = vrsqrt.pop %v1391
        %v1648 = vrsqrt.pop %v1392
        %v1649 = vrsqrt.pop %v1393
        %v1650 = vrsqrt.pop %v1394
        %v1651 = vrsqrt.pop %v1395
        %v1652 = vrsqrt.pop %v1396
        %v1653 = vrsqrt.pop %v1397
        %v1654 = vrsqrt.pop %v1398
        %v1655 = vrsqrt.pop %v1399
        %v1656 = vrsqrt.pop %v1400
        %v1657 = vrsqrt.pop %v1401
        %v1658 = vrsqrt.pop %v1402
        %v1659 = vrsqrt.pop %v1403
        %v1660 = vrsqrt.pop %v1404
        %v1661 = vrsqrt.pop %v1405
        %v1662 = vrsqrt.pop %v1406
        %v1663 = vrsqrt.pop %v1407
        %v1664 = vrsqrt.pop %v1408
        %v1665 = vrsqrt.pop %v1409
        %v1666 = vrsqrt.pop %v1410
        %v1667 = vrsqrt.pop %v1411
        %v1668 = vrsqrt.pop %v1412
        %v1669 = vrsqrt.pop %v1413
        %v1670 = vrsqrt.pop %v1414
        %v1671 = vrsqrt.pop %v1415
        %v1672 = vrsqrt.pop %v1416
        %v1673 = vrsqrt.pop %v1417
        %v1674 = vrsqrt.pop %v1418
        %v1675 = vrsqrt.pop %v1419
        %v1676 = vrsqrt.pop %v1420
        %v1677 = vrsqrt.pop %v1421
        %v1678 = vrsqrt.pop %v1422
        %v1679 = vrsqrt.pop %v1423
        %v1680 = vrsqrt.pop %v1424
        %v1681 = vrsqrt.pop %v1425
        %v1682 = vrsqrt.pop %v1426
        %v1683 = vrsqrt.pop %v1427
        %v1684 = vrsqrt.pop %v1428
        %v1685 = vrsqrt.pop %v1429
        %v1686 = vrsqrt.pop %v1430
        %v1687 = vrsqrt.pop %v1431
        %v1688 = vrsqrt.pop %v1432
        %v1689 = vrsqrt.pop %v1433
        %v1690 = vrsqrt.pop %v1434
        %v1691 = vrsqrt.pop %v1435
        %v1692 = vrsqrt.pop %v1436
        %v1693 = vrsqrt.pop %v1437
        %v1694 = vrsqrt.pop %v1438
        %v1695 = vrsqrt.pop %v1439
        %v1696 = vrsqrt.pop %v1440
        %v1697 = vrsqrt.pop %v1441
        %v1698 = vrsqrt.pop %v1442
        %v1699 = vrsqrt.pop %v1443
        %v1700 = vrsqrt.pop %v1444
        %v1701 = vrsqrt.pop %v1445
        %v1702 = vrsqrt.pop %v1446
        %v1703 = vrsqrt.pop %v1447
        %v1704 = vrsqrt.pop %v1448
        %v1705 = vrsqrt.pop %v1449
        %v1706 = vrsqrt.pop %v1450
        %v1707 = vrsqrt.pop %v1451
        %v1708 = vrsqrt.pop %v1452
        %v1709 = vrsqrt.pop %v1453
        %v1710 = vrsqrt.pop %v1454
        %v1711 = vrsqrt.pop %v1455
        %v1712 = vrsqrt.pop %v1456
        %v1713 = vrsqrt.pop %v1457
        %v1714 = vrsqrt.pop %v1458
        %v1715 = vrsqrt.pop %v1459
        %v1716 = vrsqrt.pop %v1460
        %v1717 = vrsqrt.pop %v1461
        %v1718 = vrsqrt.pop %v1462
        %v1719 = vrsqrt.pop %v1463
        %v1720 = vrsqrt.pop %v1464
        %v1721 = vrsqrt.pop %v1465
        %v1722 = vrsqrt.pop %v1466
        %v1723 = vrsqrt.pop %v1467
        %v1724 = vrsqrt.pop %v1468
        %v1725 = vrsqrt.pop %v1469
        %v1726 = vrsqrt.pop %v1470
        %v1727 = vrsqrt.pop %v1471
        %v1728 = vrsqrt.pop %v1472
        %v1729 = vrsqrt.pop %v1473
        %v1730 = vrsqrt.pop %v1474
        %v1731 = vrsqrt.pop %v1475
        %v1732 = vrsqrt.pop %v1476
        %v1733 = vrsqrt.pop %v1477
        %v1734 = vrsqrt.pop %v1478
        %v1735 = vrsqrt.pop %v1479
        %v1736 = vrsqrt.pop %v1480
        %v1737 = vrsqrt.pop %v1481
        %v1738 = vrsqrt.pop %v1482
        %v1739 = vrsqrt.pop %v1483
        %v1740 = vmul.f32 %v204, %v1484
        %v1741 = vmul.f32 %v205, %v1485
        %v1742 = vmul.f32 %v206, %v1486
        %v1743 = vmul.f32 %v207, %v1487
        %v1744 = vmul.f32 %v208, %v1488
        %v1745 = vmul.f32 %v209, %v1489
        %v1746 = vmul.f32 %v210, %v1490
        %v1747 = vmul.f32 %v211, %v1491
        %v1748 = vmul.f32 %v212, %v1492
        %v1749 = vmul.f32 %v213, %v1493
        %v1750 = vmul.f32 %v214, %v1494
        %v1751 = vmul.f32 %v215, %v1495
        %v1752 = vmul.f32 %v216, %v1496
        %v1753 = vmul.f32 %v217, %v1497
        %v1754 = vmul.f32 %v218, %v1498
        %v1755 = vmul.f32 %v219, %v1499
        %v1756 = vmul.f32 %v220, %v1500
        %v1757 = vmul.f32 %v221, %v1501
        %v1758 = vmul.f32 %v222, %v1502
        %v1759 = vmul.f32 %v223, %v1503
        %v1760 = vmul.f32 %v224, %v1504
        %v1761 = vmul.f32 %v225, %v1505
        %v1762 = vmul.f32 %v226, %v1506
        %v1763 = vmul.f32 %v227, %v1507
        %v1764 = vmul.f32 %v228, %v1508
        %v1765 = vmul.f32 %v229, %v1509
        %v1766 = vmul.f32 %v230, %v1510
        %v1767 = vmul.f32 %v231, %v1511
        %v1768 = vmul.f32 %v232, %v1512
        %v1769 = vmul.f32 %v233, %v1513
        %v1770 = vmul.f32 %v234, %v1514
        %v1771 = vmul.f32 %v235, %v1515
        %v1772 = vmul.f32 %v236, %v1516
        %v1773 = vmul.f32 %v237, %v1517
        %v1774 = vmul.f32 %v238, %v1518
        %v1775 = vmul.f32 %v239, %v1519
        %v1776 = vmul.f32 %v240, %v1520
        %v1777 = vmul.f32 %v241, %v1521
        %v1778 = vmul.f32 %v242, %v1522
        %v1779 = vmul.f32 %v243, %v1523
        %v1780 = vmul.f32 %v244, %v1524
        %v1781 = vmul.f32 %v245, %v1525
        %v1782 = vmul.f32 %v246, %v1526
        %v1783 = vmul.f32 %v247, %v1527
        %v1784 = vmul.f32 %v248, %v1528
        %v1785 = vmul.f32 %v249, %v1529
        %v1786 = vmul.f32 %v250, %v1530
        %v1787 = vmul.f32 %v251, %v1531
        %v1788 = vmul.f32 %v252, %v1532
        %v1789 = vmul.f32 %v253, %v1533
        %v1790 = vmul.f32 %v254, %v1534
        %v1791 = vmul.f32 %v255, %v1535
        %v1792 = vmul.f32 %v256, %v1536
        %v1793 = vmul.f32 %v257, %v1537
        %v1794 = vmul.f32 %v258, %v1538
        %v1795 = vmul.f32 %v259, %v1539
        %v1796 = vmul.f32 %v260, %v1540
        %v1797 = vmul.f32 %v261, %v1541
        %v1798 = vmul.f32 %v262, %v1542
        %v1799 = vmul.f32 %v263, %v1543
        %v1800 = vmul.f32 %v264, %v1544
        %v1801 = vmul.f32 %v265, %v1545
        %v1802 = vmul.f32 %v266, %v1546
        %v1803 = vmul.f32 %v267, %v1547
        %v1804 = vmul.f32 %v268, %v1548
        %v1805 = vmul.f32 %v269, %v1549
        %v1806 = vmul.f32 %v270, %v1550
        %v1807 = vmul.f32 %v271, %v1551
        %v1808 = vmul.f32 %v272, %v1552
        %v1809 = vmul.f32 %v273, %v1553
        %v1810 = vmul.f32 %v274, %v1554
        %v1811 = vmul.f32 %v275, %v1555
        %v1812 = vmul.f32 %v276, %v1556
        %v1813 = vmul.f32 %v277, %v1557
        %v1814 = vmul.f32 %v278, %v1558
        %v1815 = vmul.f32 %v279, %v1559
        %v1816 = vmul.f32 %v280, %v1560
        %v1817 = vmul.f32 %v281, %v1561
        %v1818 = vmul.f32 %v282, %v1562
        %v1819 = vmul.f32 %v283, %v1563
        %v1820 = vmul.f32 %v284, %v1564
        %v1821 = vmul.f32 %v285, %v1565
        %v1822 = vmul.f32 %v286, %v1566
        %v1823 = vmul.f32 %v287, %v1567
        %v1824 = vmul.f32 %v288, %v1568
        %v1825 = vmul.f32 %v289, %v1569
        %v1826 = vmul.f32 %v290, %v1570
        %v1827 = vmul.f32 %v291, %v1571
        %v1828 = vmul.f32 %v292, %v1572
        %v1829 = vmul.f32 %v293, %v1573
        %v1830 = vmul.f32 %v294, %v1574
        %v1831 = vmul.f32 %v295, %v1575
        %v1832 = vmul.f32 %v296, %v1576
        %v1833 = vmul.f32 %v297, %v1577
        %v1834 = vmul.f32 %v298, %v1578
        %v1835 = vmul.f32 %v299, %v1579
        %v1836 = vmul.f32 %v300, %v1580
        %v1837 = vmul.f32 %v301, %v1581
        %v1838 = vmul.f32 %v302, %v1582
        %v1839 = vmul.f32 %v303, %v1583
        %v1840 = vmul.f32 %v304, %v1584
        %v1841 = vmul.f32 %v305, %v1585
        %v1842 = vmul.f32 %v306, %v1586
        %v1843 = vmul.f32 %v307, %v1587
        %v1844 = vmul.f32 %v308, %v1588
        %v1845 = vmul.f32 %v309, %v1589
        %v1846 = vmul.f32 %v310, %v1590
        %v1847 = vmul.f32 %v311, %v1591
        %v1848 = vmul.f32 %v312, %v1592
        %v1849 = vmul.f32 %v313, %v1593
        %v1850 = vmul.f32 %v314, %v1594
        %v1851 = vmul.f32 %v315, %v1595
        %v1852 = vmul.f32 %v316, %v1596
        %v1853 = vmul.f32 %v317, %v1597
        %v1854 = vmul.f32 %v318, %v1598
        %v1855 = vmul.f32 %v319, %v1599
        %v1856 = vmul.f32 %v320, %v1600
        %v1857 = vmul.f32 %v321, %v1601
        %v1858 = vmul.f32 %v322, %v1602
        %v1859 = vmul.f32 %v323, %v1603
        %v1860 = vmul.f32 %v324, %v1604
        %v1861 = vmul.f32 %v325, %v1605
        %v1862 = vmul.f32 %v326, %v1606
        %v1863 = vmul.f32 %v327, %v1607
        %v1864 = vmul.f32 %v328, %v1608
        %v1865 = vmul.f32 %v329, %v1609
        %v1866 = vmul.f32 %v330, %v1610
        %v1867 = vmul.f32 %v331, %v1611
        %v1868 = vmul.f32 %v332, %v1612
        %v1869 = vmul.f32 %v333, %v1613
        %v1870 = vmul.f32 %v334, %v1614
        %v1871 = vmul.f32 %v335, %v1615
        %v1872 = vmul.f32 %v336, %v1616
        %v1873 = vmul.f32 %v337, %v1617
        %v1874 = vmul.f32 %v338, %v1618
        %v1875 = vmul.f32 %v339, %v1619
        %v1876 = vmul.f32 %v340, %v1620
        %v1877 = vmul.f32 %v341, %v1621
        %v1878 = vmul.f32 %v342, %v1622
        %v1879 = vmul.f32 %v343, %v1623
        %v1880 = vmul.f32 %v344, %v1624
        %v1881 = vmul.f32 %v345, %v1625
        %v1882 = vmul.f32 %v346, %v1626
        %v1883 = vmul.f32 %v347, %v1627
        %v1884 = vmul.f32 %v348, %v1628
        %v1885 = vmul.f32 %v349, %v1629
        %v1886 = vmul.f32 %v350, %v1630
        %v1887 = vmul.f32 %v351, %v1631
        %v1888 = vmul.f32 %v352, %v1632
        %v1889 = vmul.f32 %v353, %v1633
        %v1890 = vmul.f32 %v354, %v1634
        %v1891 = vmul.f32 %v355, %v1635
        %v1892 = vmul.f32 %v356, %v1636
        %v1893 = vmul.f32 %v357, %v1637
        %v1894 = vmul.f32 %v358, %v1638
        %v1895 = vmul.f32 %v359, %v1639
        %v1896 = vmul.f32 %v360, %v1640
        %v1897 = vmul.f32 %v361, %v1641
        %v1898 = vmul.f32 %v362, %v1642
        %v1899 = vmul.f32 %v363, %v1643
        %v1900 = vmul.f32 %v364, %v1644
        %v1901 = vmul.f32 %v365, %v1645
        %v1902 = vmul.f32 %v366, %v1646
        %v1903 = vmul.f32 %v367, %v1647
        %v1904 = vmul.f32 %v368, %v1648
        %v1905 = vmul.f32 %v369, %v1649
        %v1906 = vmul.f32 %v370, %v1650
        %v1907 = vmul.f32 %v371, %v1651
        %v1908 = vmul.f32 %v372, %v1652
        %v1909 = vmul.f32 %v373, %v1653
        %v1910 = vmul.f32 %v374, %v1654
        %v1911 = vmul.f32 %v375, %v1655
        %v1912 = vmul.f32 %v376, %v1656
        %v1913 = vmul.f32 %v377, %v1657
        %v1914 = vmul.f32 %v378, %v1658
        %v1915 = vmul.f32 %v379, %v1659
        %v1916 = vmul.f32 %v380, %v1660
        %v1917 = vmul.f32 %v381, %v1661
        %v1918 = vmul.f32 %v382, %v1662
        %v1919 = vmul.f32 %v383, %v1663
        %v1920 = vmul.f32 %v384, %v1664
        %v1921 = vmul.f32 %v385, %v1665
        %v1922 = vmul.f32 %v386, %v1666
        %v1923 = vmul.f32 %v387, %v1667
        %v1924 = vmul.f32 %v388, %v1668
        %v1925 = vmul.f32 %v389, %v1669
        %v1926 = vmul.f32 %v390, %v1670
        %v1927 = vmul.f32 %v391, %v1671
        %v1928 = vmul.f32 %v392, %v1672
        %v1929 = vmul.f32 %v393, %v1673
        %v1930 = vmul.f32 %v394, %v1674
        %v1931 = vmul.f32 %v395, %v1675
        %v1932 = vmul.f32 %v396, %v1676
        %v1933 = vmul.f32 %v397, %v1677
        %v1934 = vmul.f32 %v398, %v1678
        %v1935 = vmul.f32 %v399, %v1679
        %v1936 = vmul.f32 %v400, %v1680
        %v1937 = vmul.f32 %v401, %v1681
        %v1938 = vmul.f32 %v402, %v1682
        %v1939 = vmul.f32 %v403, %v1683
        %v1940 = vmul.f32 %v404, %v1684
        %v1941 = vmul.f32 %v405, %v1685
        %v1942 = vmul.f32 %v406, %v1686
        %v1943 = vmul.f32 %v407, %v1687
        %v1944 = vmul.f32 %v408, %v1688
        %v1945 = vmul.f32 %v409, %v1689
        %v1946 = vmul.f32 %v410, %v1690
        %v1947 = vmul.f32 %v411, %v1691
        %v1948 = vmul.f32 %v412, %v1692
        %v1949 = vmul.f32 %v413, %v1693
        %v1950 = vmul.f32 %v414, %v1694
        %v1951 = vmul.f32 %v415, %v1695
        %v1952 = vmul.f32 %v416, %v1696
        %v1953 = vmul.f32 %v417, %v1697
        %v1954 = vmul.f32 %v418, %v1698
        %v1955 = vmul.f32 %v419, %v1699
        %v1956 = vmul.f32 %v420, %v1700
        %v1957 = vmul.f32 %v421, %v1701
        %v1958 = vmul.f32 %v422, %v1702
        %v1959 = vmul.f32 %v423, %v1703
        %v1960 = vmul.f32 %v424, %v1704
        %v1961 = vmul.f32 %v425, %v1705
        %v1962 = vmul.f32 %v426, %v1706
        %v1963 = vmul.f32 %v427, %v1707
        %v1964 = vmul.f32 %v428, %v1708
        %v1965 = vmul.f32 %v429, %v1709
        %v1966 = vmul.f32 %v430, %v1710
        %v1967 = vmul.f32 %v431, %v1711
        %v1968 = vmul.f32 %v432, %v1712
        %v1969 = vmul.f32 %v433, %v1713
        %v1970 = vmul.f32 %v434, %v1714
        %v1971 = vmul.f32 %v435, %v1715
        %v1972 = vmul.f32 %v436, %v1716
        %v1973 = vmul.f32 %v437, %v1717
        %v1974 = vmul.f32 %v438, %v1718
        %v1975 = vmul.f32 %v439, %v1719
        %v1976 = vmul.f32 %v440, %v1720
        %v1977 = vmul.f32 %v441, %v1721
        %v1978 = vmul.f32 %v442, %v1722
        %v1979 = vmul.f32 %v443, %v1723
        %v1980 = vmul.f32 %v444, %v1724
        %v1981 = vmul.f32 %v445, %v1725
        %v1982 = vmul.f32 %v446, %v1726
        %v1983 = vmul.f32 %v447, %v1727
        %v1984 = vmul.f32 %v448, %v1728
        %v1985 = vmul.f32 %v449, %v1729
        %v1986 = vmul.f32 %v450, %v1730
        %v1987 = vmul.f32 %v451, %v1731
        %v1988 = vmul.f32 %v452, %v1732
        %v1989 = vmul.f32 %v453, %v1733
        %v1990 = vmul.f32 %v454, %v1734
        %v1991 = vmul.f32 %v455, %v1735
        %v1992 = vmul.f32 %v456, %v1736
        %v1993 = vmul.f32 %v457, %v1737
        %v1994 = vmul.f32 %v458, %v1738
        %v1995 = vmul.f32 %v459, %v1739
        %v1996 = vld [vmem:[#allocation2] sm:$0xff]
        %1997 = vmatprep.subr.mxu0 0.0
        %1998 = vmatpush1.xpose.msra.mxu0 %v1740
        %1999 = vmatprep.subr.mxu0 0.0
        %2000 = vmatpush1.xpose.msra.mxu0 %v1741
        %2001 = vmatprep.subr.mxu0 0.0
        %2002 = vmatpush1.xpose.msra.mxu0 %v1742
        %2003 = vmatprep.subr.mxu0 0.0
        %2004 = vmatpush1.xpose.msra.mxu0 %v1743
        %2005 = vmatprep.subr.mxu0 0.0
        %2006 = vmatpush1.xpose.msra.mxu0 %v1744
        %2007 = vmatprep.subr.mxu0 0.0
        %2008 = vmatpush1.xpose.msra.mxu0 %v1745
        %2009 = vmatprep.subr.mxu0 0.0
        %2010 = vmatpush1.xpose.msra.mxu0 %v1746
        %2011 = vmatprep.subr.mxu0 0.0
        %2012 = vmatpush1.xpose.msra.mxu0 %v1747
        %2013 = vmatprep.subr.mxu0 0.0
        %2014 = vmatpush1.xpose.msra.mxu0 %v1748
        %2015 = vmatprep.subr.mxu0 0.0
        %2016 = vmatpush1.xpose.msra.mxu0 %v1749
        %2017 = vmatprep.subr.mxu0 0.0
        %2018 = vmatpush1.xpose.msra.mxu0 %v1750
        %2019 = vmatprep.subr.mxu0 0.0
        %2020 = vmatpush1.xpose.msra.mxu0 %v1751
        %2021 = vmatprep.subr.mxu0 0.0
        %2022 = vmatpush1.xpose.msra.mxu0 %v1752
        %2023 = vmatprep.subr.mxu0 0.0
        %2024 = vmatpush1.xpose.msra.mxu0 %v1753
        %2025 = vmatprep.subr.mxu0 0.0
        %2026 = vmatpush1.xpose.msra.mxu0 %v1754
        %2027 = vmatprep.subr.mxu0 0.0
        %2028 = vmatpush1.xpose.msra.mxu0 %v1755
        %2029 = vmatprep.subr.mxu0 0.0
        %2030 = vmatpush1.xpose.msra.mxu0 %v1756
        %2031 = vmatprep.subr.mxu0 0.0
        %2032 = vmatpush1.xpose.msra.mxu0 %v1757
        %2033 = vmatprep.subr.mxu0 0.0
        %2034 = vmatpush1.xpose.msra.mxu0 %v1758
        %2035 = vmatprep.subr.mxu0 0.0
        %2036 = vmatpush1.xpose.msra.mxu0 %v1759
        %2037 = vmatprep.subr.mxu0 0.0
        %2038 = vmatpush1.xpose.msra.mxu0 %v1760
        %2039 = vmatprep.subr.mxu0 0.0
        %2040 = vmatpush1.xpose.msra.mxu0 %v1761
        %2041 = vmatprep.subr.mxu0 0.0
        %2042 = vmatpush1.xpose.msra.mxu0 %v1762
        %2043 = vmatprep.subr.mxu0 0.0
        %2044 = vmatpush1.xpose.msra.mxu0 %v1763
        %2045 = vmatprep.subr.mxu0 0.0
        %2046 = vmatpush1.xpose.msra.mxu0 %v1764
        %2047 = vmatprep.subr.mxu0 0.0
        %2048 = vmatpush1.xpose.msra.mxu0 %v1765
        %2049 = vmatprep.subr.mxu0 0.0
        %2050 = vmatpush1.xpose.msra.mxu0 %v1766
        %2051 = vmatprep.subr.mxu0 0.0
        %2052 = vmatpush1.xpose.msra.mxu0 %v1767
        %2053 = vmatprep.subr.mxu0 0.0
        %2054 = vmatpush1.xpose.msra.mxu0 %v1768
        %2055 = vmatprep.subr.mxu0 0.0
        %2056 = vmatpush1.xpose.msra.mxu0 %v1769
        %2057 = vmatprep.subr.mxu0 0.0
        %2058 = vmatpush1.xpose.msra.mxu0 %v1770
        %2059 = vmatprep.subr.mxu0 0.0
        %2060 = vmatpush1.xpose.msra.mxu0 %v1771
        %2061 = vmatprep.mubr.f32.mxu0 0.0
        %2062 = vmatmul.mubr.f32.gmra.mrb[0].mxu0 %v1996
        %v2063 = vpop.f32.mrb[0].mxu0
        %v2064 = vadd.f32 0.0, %v2063
        %v2065 = vpop.f32.mrb[0].mxu0
        %v2066 = vadd.f32 0.0, %v2065
        %2067 = vdwg.mxu0
        %2068 = vmatprep.subr.mxu0 0.0
        %2069 = vmatpush1.xpose.msra.mxu0 %v1772
        %2070 = vmatprep.subr.mxu0 0.0
        %2071 = vmatpush1.xpose.msra.mxu0 %v1773
        %2072 = vmatprep.subr.mxu0 0.0
        %2073 = vmatpush1.xpose.msra.mxu0 %v1774
        %2074 = vmatprep.subr.mxu0 0.0
        %2075 = vmatpush1.xpose.msra.mxu0 %v1775
        %2076 = vmatprep.subr.mxu0 0.0
        %2077 = vmatpush1.xpose.msra.mxu0 %v1776
        %2078 = vmatprep.subr.mxu0 0.0
        %2079 = vmatpush1.xpose.msra.mxu0 %v1777
        %2080 = vmatprep.subr.mxu0 0.0
        %2081 = vmatpush1.xpose.msra.mxu0 %v1778
        %2082 = vmatprep.subr.mxu0 0.0
        %2083 = vmatpush1.xpose.msra.mxu0 %v1779
        %2084 = vmatprep.subr.mxu0 0.0
        %2085 = vmatpush1.xpose.msra.mxu0 %v1780
        %2086 = vmatprep.subr.mxu0 0.0
        %2087 = vmatpush1.xpose.msra.mxu0 %v1781
        %2088 = vmatprep.subr.mxu0 0.0
        %2089 = vmatpush1.xpose.msra.mxu0 %v1782
        %2090 = vmatprep.subr.mxu0 0.0
        %2091 = vmatpush1.xpose.msra.mxu0 %v1783
        %2092 = vmatprep.subr.mxu0 0.0
        %2093 = vmatpush1.xpose.msra.mxu0 %v1784
        %2094 = vmatprep.subr.mxu0 0.0
        %2095 = vmatpush1.xpose.msra.mxu0 %v1785
        %2096 = vmatprep.subr.mxu0 0.0
        %2097 = vmatpush1.xpose.msra.mxu0 %v1786
        %2098 = vmatprep.subr.mxu0 0.0
        %2099 = vmatpush1.xpose.msra.mxu0 %v1787
        %2100 = vmatprep.subr.mxu0 0.0
        %2101 = vmatpush1.xpose.msra.mxu0 %v1788
        %2102 = vmatprep.subr.mxu0 0.0
        %2103 = vmatpush1.xpose.msra.mxu0 %v1789
        %2104 = vmatprep.subr.mxu0 0.0
        %2105 = vmatpush1.xpose.msra.mxu0 %v1790
        %2106 = vmatprep.subr.mxu0 0.0
        %2107 = vmatpush1.xpose.msra.mxu0 %v1791
        %2108 = vmatprep.subr.mxu0 0.0
        %2109 = vmatpush1.xpose.msra.mxu0 %v1792
        %2110 = vmatprep.subr.mxu0 0.0
        %2111 = vmatpush1.xpose.msra.mxu0 %v1793
        %2112 = vmatprep.subr.mxu0 0.0
        %2113 = vmatpush1.xpose.msra.mxu0 %v1794
        %2114 = vmatprep.subr.mxu0 0.0
        %2115 = vmatpush1.xpose.msra.mxu0 %v1795
        %2116 = vmatprep.subr.mxu0 0.0
        %2117 = vmatpush1.xpose.msra.mxu0 %v1796
        %2118 = vmatprep.subr.mxu0 0.0
        %2119 = vmatpush1.xpose.msra.mxu0 %v1797
        %2120 = vmatprep.subr.mxu0 0.0
        %2121 = vmatpush1.xpose.msra.mxu0 %v1798
        %2122 = vmatprep.subr.mxu0 0.0
        %2123 = vmatpush1.xpose.msra.mxu0 %v1799
        %2124 = vmatprep.subr.mxu0 0.0
        %2125 = vmatpush1.xpose.msra.mxu0 %v1800
        %2126 = vmatprep.subr.mxu0 0.0
        %2127 = vmatpush1.xpose.msra.mxu0 %v1801
        %2128 = vmatprep.subr.mxu0 0.0
        %2129 = vmatpush1.xpose.msra.mxu0 %v1802
        %2130 = vmatprep.subr.mxu0 0.0
        %2131 = vmatpush1.xpose.msra.mxu0 %v1803
        %2132 = vmatprep.mubr.f32.mxu0 0.0
        %2133 = vmatmul.mubr.f32.gmra.mrb[0].mxu0 %v1996
        %v2134 = vpop.f32.mrb[0].mxu0
        %v2135 = vadd.f32 0.0, %v2134
        %v2136 = vpop.f32.mrb[0].mxu0
        %v2137 = vadd.f32 0.0, %v2136
        %2138 = vdwg.mxu0
        %2139 = vmatprep.subr.mxu0 0.0
        %2140 = vmatpush1.xpose.msra.mxu0 %v1804
        %2141 = vmatprep.subr.mxu0 0.0
        %2142 = vmatpush1.xpose.msra.mxu0 %v1805
        %2143 = vmatprep.subr.mxu0 0.0
        %2144 = vmatpush1.xpose.msra.mxu0 %v1806
        %2145 = vmatprep.subr.mxu0 0.0
        %2146 = vmatpush1.xpose.msra.mxu0 %v1807
        %2147 = vmatprep.subr.mxu0 0.0
        %2148 = vmatpush1.xpose.msra.mxu0 %v1808
        %2149 = vmatprep.subr.mxu0 0.0
        %2150 = vmatpush1.xpose.msra.mxu0 %v1809
        %2151 = vmatprep.subr.mxu0 0.0
        %2152 = vmatpush1.xpose.msra.mxu0 %v1810
        %2153 = vmatprep.subr.mxu0 0.0
        %2154 = vmatpush1.xpose.msra.mxu0 %v1811
        %2155 = vmatprep.subr.mxu0 0.0
        %2156 = vmatpush1.xpose.msra.mxu0 %v1812
        %2157 = vmatprep.subr.mxu0 0.0
        %2158 = vmatpush1.xpose.msra.mxu0 %v1813
        %2159 = vmatprep.subr.mxu0 0.0
        %2160 = vmatpush1.xpose.msra.mxu0 %v1814
        %2161 = vmatprep.subr.mxu0 0.0
        %2162 = vmatpush1.xpose.msra.mxu0 %v1815
        %2163 = vmatprep.subr.mxu0 0.0
        %2164 = vmatpush1.xpose.msra.mxu0 %v1816
        %2165 = vmatprep.subr.mxu0 0.0
        %2166 = vmatpush1.xpose.msra.mxu0 %v1817
        %2167 = vmatprep.subr.mxu0 0.0
        %2168 = vmatpush1.xpose.msra.mxu0 %v1818
        %2169 = vmatprep.subr.mxu0 0.0
        %2170 = vmatpush1.xpose.msra.mxu0 %v1819
        %2171 = vmatprep.subr.mxu0 0.0
        %2172 = vmatpush1.xpose.msra.mxu0 %v1820
        %2173 = vmatprep.subr.mxu0 0.0
        %2174 = vmatpush1.xpose.msra.mxu0 %v1821
        %2175 = vmatprep.subr.mxu0 0.0
        %2176 = vmatpush1.xpose.msra.mxu0 %v1822
        %2177 = vmatprep.subr.mxu0 0.0
        %2178 = vmatpush1.xpose.msra.mxu0 %v1823
        %2179 = vmatprep.subr.mxu0 0.0
        %2180 = vmatpush1.xpose.msra.mxu0 %v1824
        %2181 = vmatprep.subr.mxu0 0.0
        %2182 = vmatpush1.xpose.msra.mxu0 %v1825
        %2183 = vmatprep.subr.mxu0 0.0
        %2184 = vmatpush1.xpose.msra.mxu0 %v1826
        %2185 = vmatprep.subr.mxu0 0.0
        %2186 = vmatpush1.xpose.msra.mxu0 %v1827
        %2187 = vmatprep.subr.mxu0 0.0
        %2188 = vmatpush1.xpose.msra.mxu0 %v1828
        %2189 = vmatprep.subr.mxu0 0.0
        %2190 = vmatpush1.xpose.msra.mxu0 %v1829
        %2191 = vmatprep.subr.mxu0 0.0
        %2192 = vmatpush1.xpose.msra.mxu0 %v1830
        %2193 = vmatprep.subr.mxu0 0.0
        %2194 = vmatpush1.xpose.msra.mxu0 %v1831
        %2195 = vmatprep.subr.mxu0 0.0
        %2196 = vmatpush1.xpose.msra.mxu0 %v1832
        %2197 = vmatprep.subr.mxu0 0.0
        %2198 = vmatpush1.xpose.msra.mxu0 %v1833
        %2199 = vmatprep.subr.mxu0 0.0
        %2200 = vmatpush1.xpose.msra.mxu0 %v1834
        %2201 = vmatprep.subr.mxu0 0.0
        %2202 = vmatpush1.xpose.msra.mxu0 %v1835
        %2203 = vmatprep.mubr.f32.mxu0 0.0
        %2204 = vmatmul.mubr.f32.gmra.mrb[0].mxu0 %v1996
        %v2205 = vpop.f32.mrb[0].mxu0
        %v2206 = vadd.f32 0.0, %v2205
        %v2207 = vpop.f32.mrb[0].mxu0
        %v2208 = vadd.f32 0.0, %v2207
        %2209 = vdwg.mxu0
        %2210 = vmatprep.subr.mxu0 0.0
        %2211 = vmatpush1.xpose.msra.mxu0 %v1836
        %2212 = vmatprep.subr.mxu0 0.0
        %2213 = vmatpush1.xpose.msra.mxu0 %v1837
        %2214 = vmatprep.subr.mxu0 0.0
        %2215 = vmatpush1.xpose.msra.mxu0 %v1838
        %2216 = vmatprep.subr.mxu0 0.0
        %2217 = vmatpush1.xpose.msra.mxu0 %v1839
        %2218 = vmatprep.subr.mxu0 0.0
        %2219 = vmatpush1.xpose.msra.mxu0 %v1840
        %2220 = vmatprep.subr.mxu0 0.0
        %2221 = vmatpush1.xpose.msra.mxu0 %v1841
        %2222 = vmatprep.subr.mxu0 0.0
        %2223 = vmatpush1.xpose.msra.mxu0 %v1842
        %2224 = vmatprep.subr.mxu0 0.0
        %2225 = vmatpush1.xpose.msra.mxu0 %v1843
        %2226 = vmatprep.subr.mxu0 0.0
        %2227 = vmatpush1.xpose.msra.mxu0 %v1844
        %2228 = vmatprep.subr.mxu0 0.0
        %2229 = vmatpush1.xpose.msra.mxu0 %v1845
        %2230 = vmatprep.subr.mxu0 0.0
        %2231 = vmatpush1.xpose.msra.mxu0 %v1846
        %2232 = vmatprep.subr.mxu0 0.0
        %2233 = vmatpush1.xpose.msra.mxu0 %v1847
        %2234 = vmatprep.subr.mxu0 0.0
        %2235 = vmatpush1.xpose.msra.mxu0 %v1848
        %2236 = vmatprep.subr.mxu0 0.0
        %2237 = vmatpush1.xpose.msra.mxu0 %v1849
        %2238 = vmatprep.subr.mxu0 0.0
        %2239 = vmatpush1.xpose.msra.mxu0 %v1850
        %2240 = vmatprep.subr.mxu0 0.0
        %2241 = vmatpush1.xpose.msra.mxu0 %v1851
        %2242 = vmatprep.subr.mxu0 0.0
        %2243 = vmatpush1.xpose.msra.mxu0 %v1852
        %2244 = vmatprep.subr.mxu0 0.0
        %2245 = vmatpush1.xpose.msra.mxu0 %v1853
        %2246 = vmatprep.subr.mxu0 0.0
        %2247 = vmatpush1.xpose.msra.mxu0 %v1854
        %2248 = vmatprep.subr.mxu0 0.0
        %2249 = vmatpush1.xpose.msra.mxu0 %v1855
        %2250 = vmatprep.subr.mxu0 0.0
        %2251 = vmatpush1.xpose.msra.mxu0 %v1856
        %2252 = vmatprep.subr.mxu0 0.0
        %2253 = vmatpush1.xpose.msra.mxu0 %v1857
        %2254 = vmatprep.subr.mxu0 0.0
        %2255 = vmatpush1.xpose.msra.mxu0 %v1858
        %2256 = vmatprep.subr.mxu0 0.0
        %2257 = vmatpush1.xpose.msra.mxu0 %v1859
        %2258 = vmatprep.subr.mxu0 0.0
        %2259 = vmatpush1.xpose.msra.mxu0 %v1860
        %2260 = vmatprep.subr.mxu0 0.0
        %2261 = vmatpush1.xpose.msra.mxu0 %v1861
        %2262 = vmatprep.subr.mxu0 0.0
        %2263 = vmatpush1.xpose.msra.mxu0 %v1862
        %2264 = vmatprep.subr.mxu0 0.0
        %2265 = vmatpush1.xpose.msra.mxu0 %v1863
        %2266 = vmatprep.subr.mxu0 0.0
        %2267 = vmatpush1.xpose.msra.mxu0 %v1864
        %2268 = vmatprep.subr.mxu0 0.0
        %2269 = vmatpush1.xpose.msra.mxu0 %v1865
        %2270 = vmatprep.subr.mxu0 0.0
        %2271 = vmatpush1.xpose.msra.mxu0 %v1866
        %2272 = vmatprep.subr.mxu0 0.0
        %2273 = vmatpush1.xpose.msra.mxu0 %v1867
        %2274 = vmatprep.mubr.f32.mxu0 0.0
        %2275 = vmatmul.mubr.f32.gmra.mrb[0].mxu0 %v1996
        %v2276 = vpop.f32.mrb[0].mxu0
        %v2277 = vadd.f32 0.0, %v2276
        %v2278 = vpop.f32.mrb[0].mxu0
        %v2279 = vadd.f32 0.0, %v2278
        %2280 = vdwg.mxu0
        %2281 = vmatprep.subr.mxu0 0.0
        %2282 = vmatpush1.xpose.msra.mxu0 %v1868
        %2283 = vmatprep.subr.mxu0 0.0
        %2284 = vmatpush1.xpose.msra.mxu0 %v1869
        %2285 = vmatprep.subr.mxu0 0.0
        %2286 = vmatpush1.xpose.msra.mxu0 %v1870
        %2287 = vmatprep.subr.mxu0 0.0
        %2288 = vmatpush1.xpose.msra.mxu0 %v1871
        %2289 = vmatprep.subr.mxu0 0.0
        %2290 = vmatpush1.xpose.msra.mxu0 %v1872
        %2291 = vmatprep.subr.mxu0 0.0
        %2292 = vmatpush1.xpose.msra.mxu0 %v1873
        %2293 = vmatprep.subr.mxu0 0.0
        %2294 = vmatpush1.xpose.msra.mxu0 %v1874
        %2295 = vmatprep.subr.mxu0 0.0
        %2296 = vmatpush1.xpose.msra.mxu0 %v1875
        %2297 = vmatprep.subr.mxu0 0.0
        %2298 = vmatpush1.xpose.msra.mxu0 %v1876
        %2299 = vmatprep.subr.mxu0 0.0
        %2300 = vmatpush1.xpose.msra.mxu0 %v1877
        %2301 = vmatprep.subr.mxu0 0.0
        %2302 = vmatpush1.xpose.msra.mxu0 %v1878
        %2303 = vmatprep.subr.mxu0 0.0
        %2304 = vmatpush1.xpose.msra.mxu0 %v1879
        %2305 = vmatprep.subr.mxu0 0.0
        %2306 = vmatpush1.xpose.msra.mxu0 %v1880
        %2307 = vmatprep.subr.mxu0 0.0
        %2308 = vmatpush1.xpose.msra.mxu0 %v1881
        %2309 = vmatprep.subr.mxu0 0.0
        %2310 = vmatpush1.xpose.msra.mxu0 %v1882
        %2311 = vmatprep.subr.mxu0 0.0
        %2312 = vmatpush1.xpose.msra.mxu0 %v1883
        %2313 = vmatprep.subr.mxu0 0.0
        %2314 = vmatpush1.xpose.msra.mxu0 %v1884
        %2315 = vmatprep.subr.mxu0 0.0
        %2316 = vmatpush1.xpose.msra.mxu0 %v1885
        %2317 = vmatprep.subr.mxu0 0.0
        %2318 = vmatpush1.xpose.msra.mxu0 %v1886
        %2319 = vmatprep.subr.mxu0 0.0
        %2320 = vmatpush1.xpose.msra.mxu0 %v1887
        %2321 = vmatprep.subr.mxu0 0.0
        %2322 = vmatpush1.xpose.msra.mxu0 %v1888
        %2323 = vmatprep.subr.mxu0 0.0
        %2324 = vmatpush1.xpose.msra.mxu0 %v1889
        %2325 = vmatprep.subr.mxu0 0.0
        %2326 = vmatpush1.xpose.msra.mxu0 %v1890
        %2327 = vmatprep.subr.mxu0 0.0
        %2328 = vmatpush1.xpose.msra.mxu0 %v1891
        %2329 = vmatprep.subr.mxu0 0.0
        %2330 = vmatpush1.xpose.msra.mxu0 %v1892
        %2331 = vmatprep.subr.mxu0 0.0
        %2332 = vmatpush1.xpose.msra.mxu0 %v1893
        %2333 = vmatprep.subr.mxu0 0.0
        %2334 = vmatpush1.xpose.msra.mxu0 %v1894
        %2335 = vmatprep.subr.mxu0 0.0
        %2336 = vmatpush1.xpose.msra.mxu0 %v1895
        %2337 = vmatprep.subr.mxu0 0.0
        %2338 = vmatpush1.xpose.msra.mxu0 %v1896
        %2339 = vmatprep.subr.mxu0 0.0
        %2340 = vmatpush1.xpose.msra.mxu0 %v1897
        %2341 = vmatprep.subr.mxu0 0.0
        %2342 = vmatpush1.xpose.msra.mxu0 %v1898
        %2343 = vmatprep.subr.mxu0 0.0
        %2344 = vmatpush1.xpose.msra.mxu0 %v1899
        %2345 = vmatprep.mubr.f32.mxu0 0.0
        %2346 = vmatmul.mubr.f32.gmra.mrb[0].mxu0 %v1996
        %v2347 = vpop.f32.mrb[0].mxu0
        %v2348 = vadd.f32 0.0, %v2347
        %v2349 = vpop.f32.mrb[0].mxu0
        %v2350 = vadd.f32 0.0, %v2349
        %2351 = vdwg.mxu0
        %2352 = vmatprep.subr.mxu0 0.0
        %2353 = vmatpush1.xpose.msra.mxu0 %v1900
        %2354 = vmatprep.subr.mxu0 0.0
        %2355 = vmatpush1.xpose.msra.mxu0 %v1901
        %2356 = vmatprep.subr.mxu0 0.0
        %2357 = vmatpush1.xpose.msra.mxu0 %v1902
        %2358 = vmatprep.subr.mxu0 0.0
        %2359 = vmatpush1.xpose.msra.mxu0 %v1903
        %2360 = vmatprep.subr.mxu0 0.0
        %2361 = vmatpush1.xpose.msra.mxu0 %v1904
        %2362 = vmatprep.subr.mxu0 0.0
        %2363 = vmatpush1.xpose.msra.mxu0 %v1905
        %2364 = vmatprep.subr.mxu0 0.0
        %2365 = vmatpush1.xpose.msra.mxu0 %v1906
        %2366 = vmatprep.subr.mxu0 0.0
        %2367 = vmatpush1.xpose.msra.mxu0 %v1907
        %2368 = vmatprep.subr.mxu0 0.0
        %2369 = vmatpush1.xpose.msra.mxu0 %v1908
        %2370 = vmatprep.subr.mxu0 0.0
        %2371 = vmatpush1.xpose.msra.mxu0 %v1909
        %2372 = vmatprep.subr.mxu0 0.0
        %2373 = vmatpush1.xpose.msra.mxu0 %v1910
        %2374 = vmatprep.subr.mxu0 0.0
        %2375 = vmatpush1.xpose.msra.mxu0 %v1911
        %2376 = vmatprep.subr.mxu0 0.0
        %2377 = vmatpush1.xpose.msra.mxu0 %v1912
        %2378 = vmatprep.subr.mxu0 0.0
        %2379 = vmatpush1.xpose.msra.mxu0 %v1913
        %2380 = vmatprep.subr.mxu0 0.0
        %2381 = vmatpush1.xpose.msra.mxu0 %v1914
        %2382 = vmatprep.subr.mxu0 0.0
        %2383 = vmatpush1.xpose.msra.mxu0 %v1915
        %2384 = vmatprep.subr.mxu0 0.0
        %2385 = vmatpush1.xpose.msra.mxu0 %v1916
        %2386 = vmatprep.subr.mxu0 0.0
        %2387 = vmatpush1.xpose.msra.mxu0 %v1917
        %2388 = vmatprep.subr.mxu0 0.0
        %2389 = vmatpush1.xpose.msra.mxu0 %v1918
        %2390 = vmatprep.subr.mxu0 0.0
        %2391 = vmatpush1.xpose.msra.mxu0 %v1919
        %2392 = vmatprep.subr.mxu0 0.0
        %2393 = vmatpush1.xpose.msra.mxu0 %v1920
        %2394 = vmatprep.subr.mxu0 0.0
        %2395 = vmatpush1.xpose.msra.mxu0 %v1921
        %2396 = vmatprep.subr.mxu0 0.0
        %2397 = vmatpush1.xpose.msra.mxu0 %v1922
        %2398 = vmatprep.subr.mxu0 0.0
        %2399 = vmatpush1.xpose.msra.mxu0 %v1923
        %2400 = vmatprep.subr.mxu0 0.0
        %2401 = vmatpush1.xpose.msra.mxu0 %v1924
        %2402 = vmatprep.subr.mxu0 0.0
        %2403 = vmatpush1.xpose.msra.mxu0 %v1925
        %2404 = vmatprep.subr.mxu0 0.0
        %2405 = vmatpush1.xpose.msra.mxu0 %v1926
        %2406 = vmatprep.subr.mxu0 0.0
        %2407 = vmatpush1.xpose.msra.mxu0 %v1927
        %2408 = vmatprep.subr.mxu0 0.0
        %2409 = vmatpush1.xpose.msra.mxu0 %v1928
        %2410 = vmatprep.subr.mxu0 0.0
        %2411 = vmatpush1.xpose.msra.mxu0 %v1929
        %2412 = vmatprep.subr.mxu0 0.0
        %2413 = vmatpush1.xpose.msra.mxu0 %v1930
        %2414 = vmatprep.subr.mxu0 0.0
        %2415 = vmatpush1.xpose.msra.mxu0 %v1931
        %2416 = vmatprep.mubr.f32.mxu0 0.0
        %2417 = vmatmul.mubr.f32.gmra.mrb[0].mxu0 %v1996
        %v2418 = vpop.f32.mrb[0].mxu0
        %v2419 = vadd.f32 0.0, %v2418
        %v2420 = vpop.f32.mrb[0].mxu0
        %v2421 = vadd.f32 0.0, %v2420
        %2422 = vdwg.mxu0
        %2423 = vmatprep.subr.mxu0 0.0
        %2424 = vmatpush1.xpose.msra.mxu0 %v1932
        %2425 = vmatprep.subr.mxu0 0.0
        %2426 = vmatpush1.xpose.msra.mxu0 %v1933
        %2427 = vmatprep.subr.mxu0 0.0
        %2428 = vmatpush1.xpose.msra.mxu0 %v1934
        %2429 = vmatprep.subr.mxu0 0.0
        %2430 = vmatpush1.xpose.msra.mxu0 %v1935
        %2431 = vmatprep.subr.mxu0 0.0
        %2432 = vmatpush1.xpose.msra.mxu0 %v1936
        %2433 = vmatprep.subr.mxu0 0.0
        %2434 = vmatpush1.xpose.msra.mxu0 %v1937
        %2435 = vmatprep.subr.mxu0 0.0
        %2436 = vmatpush1.xpose.msra.mxu0 %v1938
        %2437 = vmatprep.subr.mxu0 0.0
        %2438 = vmatpush1.xpose.msra.mxu0 %v1939
        %2439 = vmatprep.subr.mxu0 0.0
        %2440 = vmatpush1.xpose.msra.mxu0 %v1940
        %2441 = vmatprep.subr.mxu0 0.0
        %2442 = vmatpush1.xpose.msra.mxu0 %v1941
        %2443 = vmatprep.subr.mxu0 0.0
        %2444 = vmatpush1.xpose.msra.mxu0 %v1942
        %2445 = vmatprep.subr.mxu0 0.0
        %2446 = vmatpush1.xpose.msra.mxu0 %v1943
        %2447 = vmatprep.subr.mxu0 0.0
        %2448 = vmatpush1.xpose.msra.mxu0 %v1944
        %2449 = vmatprep.subr.mxu0 0.0
        %2450 = vmatpush1.xpose.msra.mxu0 %v1945
        %2451 = vmatprep.subr.mxu0 0.0
        %2452 = vmatpush1.xpose.msra.mxu0 %v1946
        %2453 = vmatprep.subr.mxu0 0.0
        %2454 = vmatpush1.xpose.msra.mxu0 %v1947
        %2455 = vmatprep.subr.mxu0 0.0
        %2456 = vmatpush1.xpose.msra.mxu0 %v1948
        %2457 = vmatprep.subr.mxu0 0.0
        %2458 = vmatpush1.xpose.msra.mxu0 %v1949
        %2459 = vmatprep.subr.mxu0 0.0
        %2460 = vmatpush1.xpose.msra.mxu0 %v1950
        %2461 = vmatprep.subr.mxu0 0.0
        %2462 = vmatpush1.xpose.msra.mxu0 %v1951
        %2463 = vmatprep.subr.mxu0 0.0
        %2464 = vmatpush1.xpose.msra.mxu0 %v1952
        %2465 = vmatprep.subr.mxu0 0.0
        %2466 = vmatpush1.xpose.msra.mxu0 %v1953
        %2467 = vmatprep.subr.mxu0 0.0
        %2468 = vmatpush1.xpose.msra.mxu0 %v1954
        %2469 = vmatprep.subr.mxu0 0.0
        %2470 = vmatpush1.xpose.msra.mxu0 %v1955
        %2471 = vmatprep.subr.mxu0 0.0
        %2472 = vmatpush1.xpose.msra.mxu0 %v1956
        %2473 = vmatprep.subr.mxu0 0.0
        %2474 = vmatpush1.xpose.msra.mxu0 %v1957
        %2475 = vmatprep.subr.mxu0 0.0
        %2476 = vmatpush1.xpose.msra.mxu0 %v1958
        %2477 = vmatprep.subr.mxu0 0.0
        %2478 = vmatpush1.xpose.msra.mxu0 %v1959
        %2479 = vmatprep.subr.mxu0 0.0
        %2480 = vmatpush1.xpose.msra.mxu0 %v1960
        %2481 = vmatprep.subr.mxu0 0.0
        %2482 = vmatpush1.xpose.msra.mxu0 %v1961
        %2483 = vmatprep.subr.mxu0 0.0
        %2484 = vmatpush1.xpose.msra.mxu0 %v1962
        %2485 = vmatprep.subr.mxu0 0.0
        %2486 = vmatpush1.xpose.msra.mxu0 %v1963
        %2487 = vmatprep.mubr.f32.mxu0 0.0
        %2488 = vmatmul.mubr.f32.gmra.mrb[0].mxu0 %v1996
        %v2489 = vpop.f32.mrb[0].mxu0
        %v2490 = vadd.f32 0.0, %v2489
        %v2491 = vpop.f32.mrb[0].mxu0
        %v2492 = vadd.f32 0.0, %v2491
        %2493 = vdwg.mxu0
        %2494 = vmatprep.subr.mxu0 0.0
        %2495 = vmatpush1.xpose.msra.mxu0 %v1964
        %2496 = vmatprep.subr.mxu0 0.0
        %2497 = vmatpush1.xpose.msra.mxu0 %v1965
        %2498 = vmatprep.subr.mxu0 0.0
        %2499 = vmatpush1.xpose.msra.mxu0 %v1966
        %2500 = vmatprep.subr.mxu0 0.0
        %2501 = vmatpush1.xpose.msra.mxu0 %v1967
        %2502 = vmatprep.subr.mxu0 0.0
        %2503 = vmatpush1.xpose.msra.mxu0 %v1968
        %2504 = vmatprep.subr.mxu0 0.0
        %2505 = vmatpush1.xpose.msra.mxu0 %v1969
        %2506 = vmatprep.subr.mxu0 0.0
        %2507 = vmatpush1.xpose.msra.mxu0 %v1970
        %2508 = vmatprep.subr.mxu0 0.0
        %2509 = vmatpush1.xpose.msra.mxu0 %v1971
        %2510 = vmatprep.subr.mxu0 0.0
        %2511 = vmatpush1.xpose.msra.mxu0 %v1972
        %2512 = vmatprep.subr.mxu0 0.0
        %2513 = vmatpush1.xpose.msra.mxu0 %v1973
        %2514 = vmatprep.subr.mxu0 0.0
        %2515 = vmatpush1.xpose.msra.mxu0 %v1974
        %2516 = vmatprep.subr.mxu0 0.0
        %2517 = vmatpush1.xpose.msra.mxu0 %v1975
        %2518 = vmatprep.subr.mxu0 0.0
        %2519 = vmatpush1.xpose.msra.mxu0 %v1976
        %2520 = vmatprep.subr.mxu0 0.0
        %2521 = vmatpush1.xpose.msra.mxu0 %v1977
        %2522 = vmatprep.subr.mxu0 0.0
        %2523 = vmatpush1.xpose.msra.mxu0 %v1978
        %2524 = vmatprep.subr.mxu0 0.0
        %2525 = vmatpush1.xpose.msra.mxu0 %v1979
        %2526 = vmatprep.subr.mxu0 0.0
        %2527 = vmatpush1.xpose.msra.mxu0 %v1980
        %2528 = vmatprep.subr.mxu0 0.0
        %2529 = vmatpush1.xpose.msra.mxu0 %v1981
        %2530 = vmatprep.subr.mxu0 0.0
        %2531 = vmatpush1.xpose.msra.mxu0 %v1982
        %2532 = vmatprep.subr.mxu0 0.0
        %2533 = vmatpush1.xpose.msra.mxu0 %v1983
        %2534 = vmatprep.subr.mxu0 0.0
        %2535 = vmatpush1.xpose.msra.mxu0 %v1984
        %2536 = vmatprep.subr.mxu0 0.0
        %2537 = vmatpush1.xpose.msra.mxu0 %v1985
        %2538 = vmatprep.subr.mxu0 0.0
        %2539 = vmatpush1.xpose.msra.mxu0 %v1986
        %2540 = vmatprep.subr.mxu0 0.0
        %2541 = vmatpush1.xpose.msra.mxu0 %v1987
        %2542 = vmatprep.subr.mxu0 0.0
        %2543 = vmatpush1.xpose.msra.mxu0 %v1988
        %2544 = vmatprep.subr.mxu0 0.0
        %2545 = vmatpush1.xpose.msra.mxu0 %v1989
        %2546 = vmatprep.subr.mxu0 0.0
        %2547 = vmatpush1.xpose.msra.mxu0 %v1990
        %2548 = vmatprep.subr.mxu0 0.0
        %2549 = vmatpush1.xpose.msra.mxu0 %v1991
        %2550 = vmatprep.subr.mxu0 0.0
        %2551 = vmatpush1.xpose.msra.mxu0 %v1992
        %2552 = vmatprep.subr.mxu0 0.0
        %2553 = vmatpush1.xpose.msra.mxu0 %v1993
        %2554 = vmatprep.subr.mxu0 0.0
        %2555 = vmatpush1.xpose.msra.mxu0 %v1994
        %2556 = vmatprep.subr.mxu0 0.0
        %2557 = vmatpush1.xpose.msra.mxu0 %v1995
        %2558 = vmatprep.mubr.f32.mxu0 0.0
        %2559 = vmatmul.mubr.f32.gmra.mrb[0].mxu0 %v1996
        %v2560 = vpop.f32.mrb[0].mxu0
        %v2561 = vadd.f32 0.0, %v2560
        %v2562 = vpop.f32.mrb[0].mxu0
        %v2563 = vadd.f32 0.0, %v2562
        %2564 = vdwg.mxu0
        %v2565 = vmul.f32 %v2064, %v2064
        %v2566 = vmul.f32 %v2066, %v2066
        %v2567 = vmul.f32 %v2135, %v2135
        %v2568 = vmul.f32 %v2137, %v2137
        %v2569 = vmul.f32 %v2206, %v2206
        %v2570 = vmul.f32 %v2208, %v2208
        %v2571 = vmul.f32 %v2277, %v2277
        %v2572 = vmul.f32 %v2279, %v2279
        %v2573 = vmul.f32 %v2348, %v2348
        %v2574 = vmul.f32 %v2350, %v2350
        %v2575 = vmul.f32 %v2419, %v2419
        %v2576 = vmul.f32 %v2421, %v2421
        %v2577 = vmul.f32 %v2490, %v2490
        %v2578 = vmul.f32 %v2492, %v2492
        %v2579 = vmul.f32 %v2561, %v2561
        %v2580 = vmul.f32 %v2563, %v2563
        %v2581 = vsub.f32 1.0, %v2565
        %v2582 = vsub.f32 1.0, %v2566
        %v2583 = vsub.f32 1.0, %v2567
        %v2584 = vsub.f32 1.0, %v2568
        %v2585 = vsub.f32 1.0, %v2569
        %v2586 = vsub.f32 1.0, %v2570
        %v2587 = vsub.f32 1.0, %v2571
        %v2588 = vsub.f32 1.0, %v2572
        %v2589 = vsub.f32 1.0, %v2573
        %v2590 = vsub.f32 1.0, %v2574
        %v2591 = vsub.f32 1.0, %v2575
        %v2592 = vsub.f32 1.0, %v2576
        %v2593 = vsub.f32 1.0, %v2577
        %v2594 = vsub.f32 1.0, %v2578
        %v2595 = vsub.f32 1.0, %v2579
        %v2596 = vsub.f32 1.0, %v2580
        %v2597 = vmax.f32 %v2581, 0.0
        %v2598 = vmax.f32 %v2582, 0.0
        %v2599 = vmax.f32 %v2583, 0.0
        %v2600 = vmax.f32 %v2584, 0.0
        %v2601 = vmax.f32 %v2585, 0.0
        %v2602 = vmax.f32 %v2586, 0.0
        %v2603 = vmax.f32 %v2587, 0.0
        %v2604 = vmax.f32 %v2588, 0.0
        %v2605 = vmax.f32 %v2589, 0.0
        %v2606 = vmax.f32 %v2590, 0.0
        %v2607 = vmax.f32 %v2591, 0.0
        %v2608 = vmax.f32 %v2592, 0.0
        %v2609 = vmax.f32 %v2593, 0.0
        %v2610 = vmax.f32 %v2594, 0.0
        %v2611 = vmax.f32 %v2595, 0.0
        %v2612 = vmax.f32 %v2596, 0.0
        %v2613 = vmin.f32 %v2597, 1.0
        %v2614 = vmin.f32 %v2598, 1.0
        %v2615 = vmin.f32 %v2599, 1.0
        %v2616 = vmin.f32 %v2600, 1.0
        %v2617 = vmin.f32 %v2601, 1.0
        %v2618 = vmin.f32 %v2602, 1.0
        %v2619 = vmin.f32 %v2603, 1.0
        %v2620 = vmin.f32 %v2604, 1.0
        %v2621 = vmin.f32 %v2605, 1.0
        %v2622 = vmin.f32 %v2606, 1.0
        %v2623 = vmin.f32 %v2607, 1.0
        %v2624 = vmin.f32 %v2608, 1.0
        %v2625 = vmin.f32 %v2609, 1.0
        %v2626 = vmin.f32 %v2610, 1.0
        %v2627 = vmin.f32 %v2611, 1.0
        %v2628 = vmin.f32 %v2612, 1.0
        %v2629 = vrsqrt.pop %v2613
        %v2630 = vmul.f32 %v2613, %v2629
        %vm2631 = vcmp.eq.f32.partialorder %v2613, inf
        %v2632 = vsel %vm2631, %v2613, %v2630
        %vm2633 = vcmp.eq.f32.partialorder %v2613, 0.0
        %v2634 = vand.u32 %v2613, 2147483648
        %v2635 = vsel %vm2633, %v2634, %v2632
        %v2636 = vrsqrt.pop %v2614
        %v2637 = vmul.f32 %v2614, %v2636
        %vm2638 = vcmp.eq.f32.partialorder %v2614, inf
        %v2639 = vsel %vm2638, %v2614, %v2637
        %vm2640 = vcmp.eq.f32.partialorder %v2614, 0.0
        %v2641 = vand.u32 %v2614, 2147483648
        %v2642 = vsel %vm2640, %v2641, %v2639
        %v2643 = vrsqrt.pop %v2615
        %v2644 = vmul.f32 %v2615, %v2643
        %vm2645 = vcmp.eq.f32.partialorder %v2615, inf
        %v2646 = vsel %vm2645, %v2615, %v2644
        %vm2647 = vcmp.eq.f32.partialorder %v2615, 0.0
        %v2648 = vand.u32 %v2615, 2147483648
        %v2649 = vsel %vm2647, %v2648, %v2646
        %v2650 = vrsqrt.pop %v2616
        %v2651 = vmul.f32 %v2616, %v2650
        %vm2652 = vcmp.eq.f32.partialorder %v2616, inf
        %v2653 = vsel %vm2652, %v2616, %v2651
        %vm2654 = vcmp.eq.f32.partialorder %v2616, 0.0
        %v2655 = vand.u32 %v2616, 2147483648
        %v2656 = vsel %vm2654, %v2655, %v2653
        %v2657 = vrsqrt.pop %v2617
        %v2658 = vmul.f32 %v2617, %v2657
        %vm2659 = vcmp.eq.f32.partialorder %v2617, inf
        %v2660 = vsel %vm2659, %v2617, %v2658
        %vm2661 = vcmp.eq.f32.partialorder %v2617, 0.0
        %v2662 = vand.u32 %v2617, 2147483648
        %v2663 = vsel %vm2661, %v2662, %v2660
        %v2664 = vrsqrt.pop %v2618
        %v2665 = vmul.f32 %v2618, %v2664
        %vm2666 = vcmp.eq.f32.partialorder %v2618, inf
        %v2667 = vsel %vm2666, %v2618, %v2665
        %vm2668 = vcmp.eq.f32.partialorder %v2618, 0.0
        %v2669 = vand.u32 %v2618, 2147483648
        %v2670 = vsel %vm2668, %v2669, %v2667
        %v2671 = vrsqrt.pop %v2619
        %v2672 = vmul.f32 %v2619, %v2671
        %vm2673 = vcmp.eq.f32.partialorder %v2619, inf
        %v2674 = vsel %vm2673, %v2619, %v2672
        %vm2675 = vcmp.eq.f32.partialorder %v2619, 0.0
        %v2676 = vand.u32 %v2619, 2147483648
        %v2677 = vsel %vm2675, %v2676, %v2674
        %v2678 = vrsqrt.pop %v2620
        %v2679 = vmul.f32 %v2620, %v2678
        %vm2680 = vcmp.eq.f32.partialorder %v2620, inf
        %v2681 = vsel %vm2680, %v2620, %v2679
        %vm2682 = vcmp.eq.f32.partialorder %v2620, 0.0
        %v2683 = vand.u32 %v2620, 2147483648
        %v2684 = vsel %vm2682, %v2683, %v2681
        %v2685 = vrsqrt.pop %v2621
        %v2686 = vmul.f32 %v2621, %v2685
        %vm2687 = vcmp.eq.f32.partialorder %v2621, inf
        %v2688 = vsel %vm2687, %v2621, %v2686
        %vm2689 = vcmp.eq.f32.partialorder %v2621, 0.0
        %v2690 = vand.u32 %v2621, 2147483648
        %v2691 = vsel %vm2689, %v2690, %v2688
        %v2692 = vrsqrt.pop %v2622
        %v2693 = vmul.f32 %v2622, %v2692
        %vm2694 = vcmp.eq.f32.partialorder %v2622, inf
        %v2695 = vsel %vm2694, %v2622, %v2693
        %vm2696 = vcmp.eq.f32.partialorder %v2622, 0.0
        %v2697 = vand.u32 %v2622, 2147483648
        %v2698 = vsel %vm2696, %v2697, %v2695
        %v2699 = vrsqrt.pop %v2623
        %v2700 = vmul.f32 %v2623, %v2699
        %vm2701 = vcmp.eq.f32.partialorder %v2623, inf
        %v2702 = vsel %vm2701, %v2623, %v2700
        %vm2703 = vcmp.eq.f32.partialorder %v2623, 0.0
        %v2704 = vand.u32 %v2623, 2147483648
        %v2705 = vsel %vm2703, %v2704, %v2702
        %v2706 = vrsqrt.pop %v2624
        %v2707 = vmul.f32 %v2624, %v2706
        %vm2708 = vcmp.eq.f32.partialorder %v2624, inf
        %v2709 = vsel %vm2708, %v2624, %v2707
        %vm2710 = vcmp.eq.f32.partialorder %v2624, 0.0
        %v2711 = vand.u32 %v2624, 2147483648
        %v2712 = vsel %vm2710, %v2711, %v2709
        %v2713 = vrsqrt.pop %v2625
        %v2714 = vmul.f32 %v2625, %v2713
        %vm2715 = vcmp.eq.f32.partialorder %v2625, inf
        %v2716 = vsel %vm2715, %v2625, %v2714
        %vm2717 = vcmp.eq.f32.partialorder %v2625, 0.0
        %v2718 = vand.u32 %v2625, 2147483648
        %v2719 = vsel %vm2717, %v2718, %v2716
        %v2720 = vrsqrt.pop %v2626
        %v2721 = vmul.f32 %v2626, %v2720
        %vm2722 = vcmp.eq.f32.partialorder %v2626, inf
        %v2723 = vsel %vm2722, %v2626, %v2721
        %vm2724 = vcmp.eq.f32.partialorder %v2626, 0.0
        %v2725 = vand.u32 %v2626, 2147483648
        %v2726 = vsel %vm2724, %v2725, %v2723
        %v2727 = vrsqrt.pop %v2627
        %v2728 = vmul.f32 %v2627, %v2727
        %vm2729 = vcmp.eq.f32.partialorder %v2627, inf
        %v2730 = vsel %vm2729, %v2627, %v2728
        %vm2731 = vcmp.eq.f32.partialorder %v2627, 0.0
        %v2732 = vand.u32 %v2627, 2147483648
        %v2733 = vsel %vm2731, %v2732, %v2730
        %v2734 = vrsqrt.pop %v2628
        %v2735 = vmul.f32 %v2628, %v2734
        %vm2736 = vcmp.eq.f32.partialorder %v2628, inf
        %v2737 = vsel %vm2736, %v2628, %v2735
        %vm2738 = vcmp.eq.f32.partialorder %v2628, 0.0
        %v2739 = vand.u32 %v2628, 2147483648
        %v2740 = vsel %vm2738, %v2739, %v2737
        %v2741 = vmul.f32 %v2064, 0.87758255
        %v2742 = vmul.f32 %v2066, 0.87758255
        %v2743 = vmul.f32 %v2135, 0.87758255
        %v2744 = vmul.f32 %v2137, 0.87758255
        %v2745 = vmul.f32 %v2206, 0.87758255
        %v2746 = vmul.f32 %v2208, 0.87758255
        %v2747 = vmul.f32 %v2277, 0.87758255
        %v2748 = vmul.f32 %v2279, 0.87758255
        %v2749 = vmul.f32 %v2348, 0.87758255
        %v2750 = vmul.f32 %v2350, 0.87758255
        %v2751 = vmul.f32 %v2419, 0.87758255
        %v2752 = vmul.f32 %v2421, 0.87758255
        %v2753 = vmul.f32 %v2490, 0.87758255
        %v2754 = vmul.f32 %v2492, 0.87758255
        %v2755 = vmul.f32 %v2561, 0.87758255
        %v2756 = vmul.f32 %v2563, 0.87758255
        %v2757 = vmul.f32 %v2635, 0.47942555
        %v2758 = vmul.f32 %v2642, 0.47942555
        %v2759 = vmul.f32 %v2649, 0.47942555
        %v2760 = vmul.f32 %v2656, 0.47942555
        %v2761 = vmul.f32 %v2663, 0.47942555
        %v2762 = vmul.f32 %v2670, 0.47942555
        %v2763 = vmul.f32 %v2677, 0.47942555
        %v2764 = vmul.f32 %v2684, 0.47942555
        %v2765 = vmul.f32 %v2691, 0.47942555
        %v2766 = vmul.f32 %v2698, 0.47942555
        %v2767 = vmul.f32 %v2705, 0.47942555
        %v2768 = vmul.f32 %v2712, 0.47942555
        %v2769 = vmul.f32 %v2719, 0.47942555
        %v2770 = vmul.f32 %v2726, 0.47942555
        %v2771 = vmul.f32 %v2733, 0.47942555
        %v2772 = vmul.f32 %v2740, 0.47942555
        %v2773 = vsub.f32 %v2741, %v2757
        %v2774 = vsub.f32 %v2742, %v2758
        %v2775 = vsub.f32 %v2743, %v2759
        %v2776 = vsub.f32 %v2744, %v2760
        %v2777 = vsub.f32 %v2745, %v2761
        %v2778 = vsub.f32 %v2746, %v2762
        %v2779 = vsub.f32 %v2747, %v2763
        %v2780 = vsub.f32 %v2748, %v2764
        %v2781 = vsub.f32 %v2749, %v2765
        %v2782 = vsub.f32 %v2750, %v2766
        %v2783 = vsub.f32 %v2751, %v2767
        %v2784 = vsub.f32 %v2752, %v2768
        %v2785 = vsub.f32 %v2753, %v2769
        %v2786 = vsub.f32 %v2754, %v2770
        %v2787 = vsub.f32 %v2755, %v2771
        %v2788 = vsub.f32 %v2756, %v2772
        %vm2789 = vcmp.gt.f32.partialorder %v2064, -0.87758255
        %vm2790 = vcmp.gt.f32.partialorder %v2066, -0.87758255
        %vm2791 = vcmp.gt.f32.partialorder %v2135, -0.87758255
        %vm2792 = vcmp.gt.f32.partialorder %v2137, -0.87758255
        %vm2793 = vcmp.gt.f32.partialorder %v2206, -0.87758255
        %vm2794 = vcmp.gt.f32.partialorder %v2208, -0.87758255
        %vm2795 = vcmp.gt.f32.partialorder %v2277, -0.87758255
        %vm2796 = vcmp.gt.f32.partialorder %v2279, -0.87758255
        %vm2797 = vcmp.gt.f32.partialorder %v2348, -0.87758255
        %vm2798 = vcmp.gt.f32.partialorder %v2350, -0.87758255
        %vm2799 = vcmp.gt.f32.partialorder %v2419, -0.87758255
        %vm2800 = vcmp.gt.f32.partialorder %v2421, -0.87758255
        %vm2801 = vcmp.gt.f32.partialorder %v2490, -0.87758255
        %vm2802 = vcmp.gt.f32.partialorder %v2492, -0.87758255
        %vm2803 = vcmp.gt.f32.partialorder %v2561, -0.87758255
        %vm2804 = vcmp.gt.f32.partialorder %v2563, -0.87758255
        %v2805 = vsub.f32 %v2064, 0.23971277
        %v2806 = vsub.f32 %v2066, 0.23971277
        %v2807 = vsub.f32 %v2135, 0.23971277
        %v2808 = vsub.f32 %v2137, 0.23971277
        %v2809 = vsub.f32 %v2206, 0.23971277
        %v2810 = vsub.f32 %v2208, 0.23971277
        %v2811 = vsub.f32 %v2277, 0.23971277
        %v2812 = vsub.f32 %v2279, 0.23971277
        %v2813 = vsub.f32 %v2348, 0.23971277
        %v2814 = vsub.f32 %v2350, 0.23971277
        %v2815 = vsub.f32 %v2419, 0.23971277
        %v2816 = vsub.f32 %v2421, 0.23971277
        %v2817 = vsub.f32 %v2490, 0.23971277
        %v2818 = vsub.f32 %v2492, 0.23971277
        %v2819 = vsub.f32 %v2561, 0.23971277
        %v2820 = vsub.f32 %v2563, 0.23971277
        %v2821 = vsel %vm2789, %v2773, %v2805
        %v2822 = vsel %vm2790, %v2774, %v2806
        %v2823 = vsel %vm2791, %v2775, %v2807
        %v2824 = vsel %vm2792, %v2776, %v2808
        %v2825 = vsel %vm2793, %v2777, %v2809
        %v2826 = vsel %vm2794, %v2778, %v2810
        %v2827 = vsel %vm2795, %v2779, %v2811
        %v2828 = vsel %vm2796, %v2780, %v2812
        %v2829 = vsel %vm2797, %v2781, %v2813
        %v2830 = vsel %vm2798, %v2782, %v2814
        %v2831 = vsel %vm2799, %v2783, %v2815
        %v2832 = vsel %vm2800, %v2784, %v2816
        %v2833 = vsel %vm2801, %v2785, %v2817
        %v2834 = vsel %vm2802, %v2786, %v2818
        %v2835 = vsel %vm2803, %v2787, %v2819
        %v2836 = vsel %vm2804, %v2788, %v2820
        %v2837 = vlaneseq
        %v2838 = vand.u32 %v2837, 127
        %v2839 = vadd.s32 %v2838, 128
        %v2840 = vadd.s32 %v2838, 256
        %v2841 = vadd.s32 %v2838, 384
        %v2842 = vadd.s32 %v2838, 512
        %v2843 = vadd.s32 %v2838, 640
        %v2844 = vadd.s32 %v2838, 768
        %v2845 = vadd.s32 %v2838, 896
        %v2846 = vadd.s32 %v2838, 1024
        %v2847 = vadd.s32 %v2838, 1152
        %v2848 = vadd.s32 %v2838, 1280
        %v2849 = vadd.s32 %v2838, 1408
        %v2850 = vadd.s32 %v2838, 1536
        %v2851 = vadd.s32 %v2838, 1664
        %v2852 = vadd.s32 %v2838, 1792
        %v2853 = vadd.s32 %v2838, 1920
        %v2854 = vld [vmem:[%s0] sm:$0xff]
        %s2855 = smul.u32 %s21, 2048
        %v2856 = vstv %s2855
        %v2857 = vsub.s32 %v2854, %v2856
        %2858 = vset.pattern.permute.xlu0 0
        %2859 = vperm.xlu0 %2858, %v2857
        %v2860 = vpop.permute.xlu0 %2859
        %vm2861 = vcmp.eq.s32.totalorder %v2838, %v2860
        %vm2862 = vcmp.eq.s32.totalorder %v2839, %v2860
        %vm2863 = vcmp.eq.s32.totalorder %v2840, %v2860
        %vm2864 = vcmp.eq.s32.totalorder %v2841, %v2860
        %vm2865 = vcmp.eq.s32.totalorder %v2842, %v2860
        %vm2866 = vcmp.eq.s32.totalorder %v2843, %v2860
        %vm2867 = vcmp.eq.s32.totalorder %v2844, %v2860
        %vm2868 = vcmp.eq.s32.totalorder %v2845, %v2860
        %vm2869 = vcmp.eq.s32.totalorder %v2846, %v2860
        %vm2870 = vcmp.eq.s32.totalorder %v2847, %v2860
        %vm2871 = vcmp.eq.s32.totalorder %v2848, %v2860
        %vm2872 = vcmp.eq.s32.totalorder %v2849, %v2860
        %vm2873 = vcmp.eq.s32.totalorder %v2850, %v2860
        %vm2874 = vcmp.eq.s32.totalorder %v2851, %v2860
        %vm2875 = vcmp.eq.s32.totalorder %v2852, %v2860
        %vm2876 = vcmp.eq.s32.totalorder %v2853, %v2860
        %v2877 = vsel %vm2861, %v2821, %v2064
        %v2878 = vsel %vm2862, %v2822, %v2066
        %v2879 = vsel %vm2863, %v2823, %v2135
        %v2880 = vsel %vm2864, %v2824, %v2137
        %v2881 = vsel %vm2865, %v2825, %v2206
        %v2882 = vsel %vm2866, %v2826, %v2208
        %v2883 = vsel %vm2867, %v2827, %v2277
        %v2884 = vsel %vm2868, %v2828, %v2279
        %v2885 = vsel %vm2869, %v2829, %v2348
        %v2886 = vsel %vm2870, %v2830, %v2350
        %v2887 = vsel %vm2871, %v2831, %v2419
        %v2888 = vsel %vm2872, %v2832, %v2421
        %v2889 = vsel %vm2873, %v2833, %v2490
        %v2890 = vsel %vm2874, %v2834, %v2492
        %v2891 = vsel %vm2875, %v2835, %v2561
        %v2892 = vsel %vm2876, %v2836, %v2563
        %v2893 = vmul.f32 %v2877, 32.0
        %v2894 = vmul.f32 %v2878, 32.0
        %v2895 = vmul.f32 %v2879, 32.0
        %v2896 = vmul.f32 %v2880, 32.0
        %v2897 = vmul.f32 %v2881, 32.0
        %v2898 = vmul.f32 %v2882, 32.0
        %v2899 = vmul.f32 %v2883, 32.0
        %v2900 = vmul.f32 %v2884, 32.0
        %v2901 = vmul.f32 %v2885, 32.0
        %v2902 = vmul.f32 %v2886, 32.0
        %v2903 = vmul.f32 %v2887, 32.0
        %v2904 = vmul.f32 %v2888, 32.0
        %v2905 = vmul.f32 %v2889, 32.0
        %v2906 = vmul.f32 %v2890, 32.0
        %v2907 = vmul.f32 %v2891, 32.0
        %v2908 = vmul.f32 %v2892, 32.0
        %2909 = vst [vmem:[%s201] sm:$0xff] %v2893
        %2910 = vst [vmem:[%s201 + $0x8] sm:$0xff] %v2894
        %2911 = vst [vmem:[%s201 + $0x10] sm:$0xff] %v2895
        %2912 = vst [vmem:[%s201 + $0x18] sm:$0xff] %v2896
        %2913 = vst [vmem:[%s201 + $0x20] sm:$0xff] %v2897
        %2914 = vst [vmem:[%s201 + $0x28] sm:$0xff] %v2898
        %2915 = vst [vmem:[%s201 + $0x30] sm:$0xff] %v2899
        %2916 = vst [vmem:[%s201 + $0x38] sm:$0xff] %v2900
        %2917 = vst [vmem:[%s201 + $0x40] sm:$0xff] %v2901
        %2918 = vst [vmem:[%s201 + $0x48] sm:$0xff] %v2902
        %2919 = vst [vmem:[%s201 + $0x50] sm:$0xff] %v2903
        %2920 = vst [vmem:[%s201 + $0x58] sm:$0xff] %v2904
        %2921 = vst [vmem:[%s201 + $0x60] sm:$0xff] %v2905
        %2922 = vst [vmem:[%s201 + $0x68] sm:$0xff] %v2906
        %2923 = vst [vmem:[%s201 + $0x70] sm:$0xff] %v2907
        %2924 = vst [vmem:[%s201 + $0x78] sm:$0xff] %v2908
        %s2925 = sand.u32 %s97, 1
        %s2926 = scalar_lea.sflag [#allocation4], %s2925
        %s2927 = sand.u32 %s97, 1
        %s2928 = smul.addr %s2927, 128
        %s2929 = scalar_lea.vmem [#allocation7], %s2928
        // Predicated region
        $region41: #{tpu_custom_call.1} parent=31 // pred_check
          %p2930 = pneg %p107
        $region42: #{tpu_custom_call.1} parent=31 // pred_check_branch
          %2932 = sbr.rel (%p2930) target = $region44
        $region43: #{tpu_custom_call.1} parent=31 // pred_region
          %s2933 = smul.u32 16, %s21
          %s2935 = ssub.s32 2048, 2048
          %2936 = vsyncadd %s2926, %s2935
          %s2937 = smul.addr %s2933, 128
          %s2938 = scalar_lea.hbm %s3, %s2937
          %s2940 = sshll.u32 %s2929, 4
          %s2941 = int_to_ptr.vmem [resolvable:$true] %s2940
          %2943 = dma.vmem_to_hbm [thread:$0]  %s2941, 2048, %s2938, %s2926
        $region44: #{tpu_custom_call.1} parent=31 // pred_fallthru
          _
      $region32: #{tpu_custom_call.1} parent=5 // pred_fallthru
        _
      %p2944 = scmp.le.s32.totalorder 2, %s16
      // Predicated region
      $region45: #{tpu_custom_call.1} parent=5 // pred_check
        %p2945 = pneg %p2944
      $region46: #{tpu_custom_call.1} parent=5 // pred_check_branch
        %2947 = sbr.rel (%p2945) target = $region48
      $region47: #{tpu_custom_call.1} parent=5 // pred_region
        %s2948 = ssub.s32 %s16, 2
        // Predicated region
        $region49: #{tpu_custom_call.1} parent=47 // pred_check
          %p2949 = pneg %p113
        $region50: #{tpu_custom_call.1} parent=47 // pred_check_branch
          %2951 = sbr.rel (%p2949) target = $region52
        $region51: #{tpu_custom_call.1} parent=47 // pred_region
          %s2952 = sand.u32 %s98, 1
          %s2953 = scalar_lea.sflag [#allocation4], %s2952
          %s2954 = sand.u32 %s98, 1
          %s2955 = smul.addr %s2954, 128
          %s2956 = scalar_lea.vmem [#allocation7], %s2955
          %2957 = dma.done %s2953, 2048
        $region52: #{tpu_custom_call.1} parent=47 // pred_fallthru
          _
      $region48: #{tpu_custom_call.1} parent=5 // pred_fallthru
        _
    $region6: #{tpu_custom_call.1} parent=1 // loop_footer
      %s20 = sadd.s32 1, %s16
    $region7: #{tpu_custom_call.1} parent=1 // loop_footer_branch
      %15 = sbr.rel target = $region3
    $region8: #{tpu_custom_call.1} parent=1 // loop_exit
      _
    %2958 = vsyncpa [#allocation3], 1
    %s2959 = scalar_lea.sflag [#allocation3], 1
    %2960 = vsyncpa %s2959, 1
    %2961 = vsyncpa [#allocation6], 1
    %s2962 = scalar_lea.sflag [#allocation6], 1
    %2963 = vsyncpa %s2962, 1
    %2964 = vsyncpa [#allocation4], 1
    %s2965 = scalar_lea.sflag [#allocation4], 1
    %2966 = vsyncpa %s2965, 1

</llo_original>
